<compile_context>
chip_gen: v6e
topology: v6e:2x2x1
jax: 0.10.0
libtpu: 0.0.40
codegen_flags: <defaults>
</compile_context>

<pallas_src>
import functools

import jax
import jax.numpy as jnp
from jax import lax
from jax.experimental import pallas as pl
from jax.experimental.pallas import tpu as pltpu

F32 = jnp.float32
BF16 = jnp.bfloat16
BN_EPS = 1e-5
NUM_CLASSES = 4
NPAD = 128           # lane-dense classifier output slab width
TS_MAX = 1024        # max spatial rows per grid step (review target: 512-2048)
SPLITS = 2           # parallel split of the spatial reduction (v7x dual-TC)


def _round_up(x, m):
    return ((x + m - 1) // m) * m


def _cdiv(a, b):
    return -(-a // b)


def _vmem_limit_bytes():
    """Generation-aware scoped-VMEM limit: ~3/4 of physical, capped at 100 MiB
    (v5e/v6e 128 MiB -> 96 MiB, v7x 64 MiB -> 48 MiB)."""
    try:
        cap = int(pltpu.get_tpu_info().vmem_capacity_bytes)
    except Exception:
        cap = 64 * 1024 * 1024
    return int(min(cap * 3 // 4, 100 * 1024 * 1024))


VMEM_LIMIT = _vmem_limit_bytes()


# ----------------------------- Pallas kernels ------------------------------ #

def _feature_pool_kernel(p_ref, stem_w_ref, stem_shift_ref, proj_w_ref,
                         psum_ref, acc_ref, *, s_valid, ts, tps):
    """Fused: stem conv (BN folded) + Hardswish -> 1x1 proj 16->960 + ReLU ->
    partial global-average-pool sum.  Grid = (B, SPLITS, tiles); the tile axis
    is the reduction ('arbitrary')."""
    t = pl.program_id(2)

    @pl.when(t == 0)
    def _():
        acc_ref[...] = jnp.zeros_like(acc_ref)

    # encoder.features[0]: conv3x3 s2 p1 (BN scale folded into W) + Hardswish
    y = jnp.dot(p_ref[0], stem_w_ref[...], preferred_element_type=jnp.float32)
    y = y + stem_shift_ref[...]
    y = y * jnp.clip(y + 3.0, 0.0, 6.0) * (1.0 / 6.0)                # (ts, 16)

    # TODO(synk): stand-in for mobilenet_v3_large features[1:]
    h = jnp.maximum(
        jnp.dot(y.astype(BF16), proj_w_ref[...],
                preferred_element_type=jnp.float32), 0.0)            # (ts, 960)

    # cdiv grid: zero the rows of the (zero-padded) trailing tiles.
    g = pl.program_id(1) * tps + t                                   # global tile id
    valid = s_valid - g * ts
    rows = lax.broadcasted_iota(jnp.int32, (ts, 1), 0)
    h = jnp.where(rows < valid, h, 0.0)

    # Per-tile accumulation with VPU adds into an (8, 960) accumulator; the
    # single cross-sublane reduce is deferred to the finalize kernel.
    acc_ref[...] += jnp.sum(h.reshape(ts // 8, 8, 960), axis=0)

    @pl.when(t == tps - 1)
    def _():
        psum_ref[0, 0] = acc_ref[...]


def _classifier_kernel(psum_ref, cls_w_ref, cls_b_ref, o_ref, *, inv_s):
    """Combine split partial sums -> global average pool -> Linear(960, NPAD).
    Dropout(0.2) is identity at eval time."""
    part = psum_ref[0]                                  # (SPLITS, 8, 960)
    pooled = jnp.sum(part, axis=0)                      # (8, 960)  VPU adds
    pooled = jnp.sum(pooled, axis=0, keepdims=True)     # (1, 960)  one XLU reduce
    pooled = pooled * inv_s                             # average pool, kept f32
    logits = jnp.dot(pooled, cls_w_ref[...],
                     preferred_element_type=jnp.float32) + cls_b_ref[...]
    o_ref[0] = jnp.broadcast_to(logits, (8, NPAD))      # lane-dense slab


def _attention_fused_kernel(p_ref, mask_ref, valid_ref, stem_w_ref,
                            stem_shift_ref, att_w_ref, att_shift_ref, o_ref,
                            *, wo):
    """Fused attention branch: stem conv+BN+Hardswish -> mask gating ->
    3x3 attention conv (bias+BN folded) -> ReLU, all in VMEM.
    The 3x3 conv is 9 shifted matmuls over the row-major flattened features;
    out-of-image taps are zeroed via precomputed validity masks (== the conv's
    zero padding).  TODO(synk): row-tile with halos (and pltpu.roll for the
    shifts) for very large images; here the whole per-image map stays in VMEM."""
    y = jnp.dot(p_ref[0], stem_w_ref[...], preferred_element_type=jnp.float32)
    y = y + stem_shift_ref[...]
    y = y * jnp.clip(y + 3.0, 0.0, 6.0) * (1.0 / 6.0)                # (S, 16)
    f = y * mask_ref[0]                                              # mask gating

    s = f.shape[0]
    acc = jnp.zeros((s, 16), jnp.float32)
    for k in range(9):
        dy, dx = k // 3 - 1, k % 3 - 1
        delta = dy * wo + dx
        delta = max(-s, min(s, delta))
        if delta == 0:
            shifted = f
        elif delta > 0:
            pad = jnp.zeros((delta, 16), jnp.float32)
            shifted = jnp.concatenate([f[delta:, :], pad], axis=0)
        else:
            pad = jnp.zeros((-delta, 16), jnp.float32)
            shifted = jnp.concatenate([pad, f[:delta, :]], axis=0)
        tap = (shifted * valid_ref[k]).astype(BF16)
        acc = acc + jnp.dot(tap, att_w_ref[k],
                            preferred_element_type=jnp.float32)
    o_ref[0] = jnp.maximum(acc + att_shift_ref[...], 0.0).astype(o_ref.dtype)


# --------------------------- gridded pallas calls --------------------------- #

def _choose_tiles(S):
    ts = min(TS_MAX, _round_up(_cdiv(S, SPLITS), 8))
    n_tiles = _cdiv(S, ts)
    tps = _cdiv(n_tiles, SPLITS)          # tiles per split
    Sp = tps * SPLITS * ts                # padded spatial extent
    return ts, tps, Sp


def _classify(params, patches_pad_bf16, B, S, ts, tps):
    kern1 = functools.partial(_feature_pool_kernel, s_valid=S, ts=ts, tps=tps)
    psum = pl.pallas_call(
        kern1,
        out_shape=jax.ShapeDtypeStruct((B, SPLITS, 8, 960), F32),
        grid_spec=pltpu.PrefetchScalarGridSpec(
            num_scalar_prefetch=0,
            grid=(B, SPLITS, tps),
            in_specs=[
                pl.BlockSpec((1, ts, 27), lambda b, p, t: (b, p * tps + t, 0)),
                pl.BlockSpec((27, 16), lambda b, p, t: (0, 0)),
                pl.BlockSpec((1, 16), lambda b, p, t: (0, 0)),
                pl.BlockSpec((16, 960), lambda b, p, t: (0, 0)),
            ],
            out_specs=pl.BlockSpec((1, 1, 8, 960), lambda b, p, t: (b, p, 0, 0)),
            scratch_shapes=[pltpu.VMEM((8, 960), jnp.float32)],
        ),
        compiler_params=pltpu.CompilerParams(
            dimension_semantics=("parallel", "parallel", "arbitrary"),
            vmem_limit_bytes=VMEM_LIMIT),
    )(patches_pad_bf16, params["stem_w"], params["stem_shift"], params["proj_w"])

    kern2 = functools.partial(_classifier_kernel, inv_s=1.0 / float(S))
    out = pl.pallas_call(
        kern2,
        out_shape=jax.ShapeDtypeStruct((B, 8, NPAD), F32),
        grid_spec=pltpu.PrefetchScalarGridSpec(
            num_scalar_prefetch=0,
            grid=(B,),
            in_specs=[
                pl.BlockSpec((1, SPLITS, 8, 960), lambda b: (b, 0, 0, 0)),
                pl.BlockSpec((960, NPAD), lambda b: (0, 0)),
                pl.BlockSpec((1, NPAD), lambda b: (0, 0)),
            ],
            out_specs=pl.BlockSpec((1, 8, NPAD), lambda b: (b, 0, 0)),
        ),
        compiler_params=pltpu.CompilerParams(
            dimension_semantics=("parallel",),
            vmem_limit_bytes=VMEM_LIMIT),
    )(psum, params["cls_w"], params["cls_b"])
    return out[:, 0, :NUM_CLASSES]        # lane-dense slab -> (B, 4)


def _attention_call(params, patches_bf16, mask_flat, tap_valid, B, S, Wo):
    kern = functools.partial(_attention_fused_kernel, wo=Wo)
    return pl.pallas_call(
        kern,
        out_shape=jax.ShapeDtypeStruct((B, S, 16), F32),
        grid_spec=pltpu.PrefetchScalarGridSpec(
            num_scalar_prefetch=0,
            grid=(B,),
            in_specs=[
                pl.BlockSpec((1, S, 27), lambda b: (b, 0, 0)),
                pl.BlockSpec((1, S, 1), lambda b: (b, 0, 0)),
                pl.BlockSpec((9, S, 1), lambda b: (0, 0, 0)),
                pl.BlockSpec((27, 16), lambda b: (0, 0)),
                pl.BlockSpec((1, 16), lambda b: (0, 0)),
                pl.BlockSpec((9, 16, 16), lambda b: (0, 0, 0)),
                pl.BlockSpec((1, 16), lambda b: (0, 0)),
            ],
            out_specs=pl.BlockSpec((1, S, 16), lambda b: (b, 0, 0)),
        ),
        compiler_params=pltpu.CompilerParams(
            dimension_semantics=("parallel",),
            vmem_limit_bytes=VMEM_LIMIT),
    )(patches_bf16, mask_flat, tap_valid, params["stem_w"],
      params["stem_shift"], params["att_w"], params["att_shift"])


# ------------------------------- JAX glue ---------------------------------- #

def _im2col(x_nhwc, ksize, stride, padding):
    """NHWC im2col -> (B, Ho*Wo, k*k*C); column order (ky, kx, c_in)."""
    B, H, W, C = x_nhwc.shape
    xp = jnp.pad(x_nhwc, ((0, 0), (padding, padding), (padding, padding), (0, 0)))
    Ho = (H + 2 * padding - ksize) // stride + 1
    Wo = (W + 2 * padding - ksize) // stride + 1
    cols = []
    for ky in range(ksize):
        for kx in range(ksize):
            cols.append(xp[:, ky:ky + stride * Ho:stride,
                           kx:kx + stride * Wo:stride, :])
    patches = jnp.concatenate(cols, axis=-1)            # (B, Ho, Wo, k*k*C)
    return patches.reshape(B, Ho * Wo, ksize * ksize * C), (Ho, Wo)


def _resize_nearest(mask_nhwc, Ho, Wo):
    """Matches F.interpolate(mode='nearest') for arbitrary ratios."""
    B, H, W, C = mask_nhwc.shape
    if (H, W) == (Ho, Wo):
        return mask_nhwc
    ridx = (jnp.arange(Ho) * H) // Ho
    cidx = (jnp.arange(Wo) * W) // Wo
    return mask_nhwc[:, ridx][:, :, cidx]


def _tap_valid_masks(Ho, Wo):
    """(9, Ho*Wo, 1) 0/1 masks: tap k=(ky*3+kx) valid where the shifted pixel
    stays inside the image (== the 3x3 conv's zero padding)."""
    rows = jnp.arange(Ho)
    cols = jnp.arange(Wo)
    taps = []
    for ky in range(3):
        for kx in range(3):
            dy, dx = ky - 1, kx - 1
            rv = ((rows + dy >= 0) & (rows + dy < Ho)).astype(F32)
            cv = ((cols + dx >= 0) & (cols + dx < Wo)).astype(F32)
            taps.append((rv[:, None] * cv[None, :]).reshape(Ho * Wo))
    return jnp.stack(taps)[:, :, None]


def _conv_w_to_mat(w_oihw):
    """(Cout, Cin, kH, kW) -> (kH*kW*Cin, Cout), matching _im2col column order."""
    cout = w_oihw.shape[0]
    return jnp.transpose(w_oihw, (2, 3, 1, 0)).reshape(-1, cout)


def init_params(key):
    ks = jax.random.split(key, 14)

    # encoder.features[0]: Conv2d(3,16,3,s2,p1,bias=False) + BN(16) + Hardswish
    stem_w = jax.random.normal(ks[0], (16, 3, 3, 3), F32) * 0.1
    stem_gamma = jax.random.uniform(ks[1], (16,), F32, 0.8, 1.2)
    stem_beta = jax.random.normal(ks[2], (16,), F32) * 0.05
    stem_mean = jax.random.normal(ks[3], (16,), F32) * 0.05
    stem_var = jax.random.uniform(ks[4], (16,), F32, 0.5, 1.5)
    stem_scale = stem_gamma / jnp.sqrt(stem_var + BN_EPS)
    stem_shift = stem_beta - stem_mean * stem_scale
    stem_w_mat = _conv_w_to_mat(stem_w) * stem_scale[None, :]     # BN folded

    # attention_conv: Conv2d(16,16,3,p1,bias=True) + BN(16, running stats) + ReLU
    att_w = jax.random.normal(ks[5], (16, 16, 3, 3), F32) * 0.05
    att_b = jax.random.normal(ks[6], (16,), F32) * 0.05
    att_gamma = jax.random.uniform(ks[7], (16,), F32, 0.8, 1.2)
    att_beta = jax.random.normal(ks[8], (16,), F32) * 0.05
    att_mean = jax.random.normal(ks[9], (16,), F32) * 0.05
    att_var = jax.random.uniform(ks[10], (16,), F32, 0.5, 1.5)
    att_scale = att_gamma / jnp.sqrt(att_var + BN_EPS)
    att_shift = att_scale * (att_b - att_mean) + att_beta         # bias+BN folded
    # per-tap (cin, cout) weights, tap order k = ky*3 + kx, BN scale folded
    att_w_taps = (jnp.transpose(att_w, (2, 3, 1, 0)).reshape(9, 16, 16)
                  * att_scale[None, None, :])

    # TODO(synk): stand-in for mobilenet_v3_large features[1:]
    proj_w = jax.random.normal(ks[11], (16, 960), F32) * 0.05

    # classifier: Dropout(0.2) [identity at eval] + Linear(960, 4), f32,
    # padded to a lane-dense 128-wide output slab.
    cls_w = jax.random.normal(ks[12], (960, NUM_CLASSES), F32) / jnp.sqrt(960.0)
    cls_b = jax.random.normal(ks[13], (NUM_CLASSES,), F32) * 0.01
    cls_w_pad = jnp.zeros((960, NPAD), F32).at[:, :NUM_CLASSES].set(cls_w)
    cls_b_pad = jnp.zeros((1, NPAD), F32).at[0, :NUM_CLASSES].set(cls_b)

    return {
        "stem_w": stem_w_mat.astype(BF16),          # (27, 16)
        "stem_shift": stem_shift.reshape(1, 16),    # f32
        "att_w": att_w_taps.astype(BF16),           # (9, 16, 16)
        "att_shift": att_shift.reshape(1, 16),      # f32
        "proj_w": proj_w.astype(BF16),              # (16, 960)
        "cls_w": cls_w_pad,                         # (960, 128) f32
        "cls_b": cls_b_pad,                         # (1, 128) f32
    }


def _forward_impl(params, x_nchw, mask_nchw=None):
    """ClassificationModel.forward logits (mask_method='attention_layer').

    In the reference, the attention branch is computed when a mask is given but
    its result never reaches the returned logits (the feature extractor re-runs
    on the original x); per the perf review it is not traced here at all --
    use `attention_forward` to compute it explicitly."""
    del mask_nchw
    x = jnp.transpose(x_nchw, (0, 2, 3, 1)).astype(F32)            # NCHW -> NHWC
    B = x.shape[0]
    patches, (Ho, Wo) = _im2col(x, ksize=3, stride=2, padding=1)
    S = Ho * Wo
    ts, tps, Sp = _choose_tiles(S)
    patches = jnp.pad(patches, ((0, 0), (0, Sp - S), (0, 0)))
    return _classify(params, patches.astype(BF16), B, S, ts, tps)


forward = jax.jit(_forward_impl)


def _attention_forward_impl(params, x_nchw, mask_nchw):
    """attention = relu(bn(attention_conv(features[0](x) * mask_resized))),
    fully fused into one pallas_call."""
    x = jnp.transpose(x_nchw, (0, 2, 3, 1)).astype(F32)
    mask = jnp.transpose(mask_nchw, (0, 2, 3, 1)).astype(F32)
    B = x.shape[0]
    patches, (Ho, Wo) = _im2col(x, ksize=3, stride=2, padding=1)
    S = Ho * Wo
    mask_flat = _resize_nearest(mask, Ho, Wo).reshape(B, S, 1)
    tap_valid = _tap_valid_masks(Ho, Wo)
    att = _attention_call(params, patches.astype(BF16), mask_flat, tap_valid,
                          B, S, Wo)
    return att.reshape(B, Ho, Wo, 16)


attention_forward = jax.jit(_attention_forward_impl)


# --------------------------- pure-JAX references ---------------------------- #

def _ref_forward(params, x_nchw):
    x = jnp.transpose(x_nchw, (0, 2, 3, 1)).astype(F32)
    patches, _ = _im2col(x, 3, 2, 1)
    y = jnp.dot(patches.astype(BF16), params["stem_w"],
                preferred_element_type=F32) + params["stem_shift"]
    y = y * jnp.clip(y + 3.0, 0.0, 6.0) / 6.0
    h = jnp.maximum(jnp.dot(y.astype(BF16), params["proj_w"],
                            preferred_element_type=F32), 0.0)
    pooled = jnp.mean(h, axis=1)
    logits = jnp.dot(pooled, params["cls_w"]) + params["cls_b"][0]
    return logits[:, :NUM_CLASSES]


def _ref_attention(params, x_nchw, mask_nchw):
    x = jnp.transpose(x_nchw, (0, 2, 3, 1)).astype(F32)
    mask = jnp.transpose(mask_nchw, (0, 2, 3, 1)).astype(F32)
    B = x.shape[0]
    patches, (Ho, Wo) = _im2col(x, 3, 2, 1)
    y = jnp.dot(patches.astype(BF16), params["stem_w"],
                preferred_element_type=F32) + params["stem_shift"]
    y = y * jnp.clip(y + 3.0, 0.0, 6.0) / 6.0
    m = _resize_nearest(mask, Ho, Wo).reshape(B, Ho * Wo, 1)
    f = (y * m).reshape(B, Ho, Wo, 16)
    ap, _ = _im2col(f, 3, 1, 1)
    a = jnp.dot(ap.astype(BF16), params["att_w"].reshape(144, 16),
                preferred_element_type=F32) + params["att_shift"]
    return jnp.maximum(a, 0.0).reshape(B, Ho, Wo, 16)


if __name__ == "__main__":
    key = jax.random.PRNGKey(0)
    kx, km, kp, kx2 = jax.random.split(key, 4)
    params = init_params(kp)

    # primary test: batch=2, 3x16x16 images + binary mask (NCHW like the module)
    x = jax.random.normal(kx, (2, 3, 16, 16), F32)
    mask = (jax.random.uniform(km, (2, 1, 16, 16)) > 0.5).astype(F32)

    logits = jax.block_until_ready(forward(params, x, mask))
    att = jax.block_until_ready(attention_forward(params, x, mask))

    assert logits.shape == (2, NUM_CLASSES) and logits.dtype == jnp.float32
    assert att.shape == (2, 8, 8, 16) and att.dtype == jnp.float32
    assert bool(jnp.all(jnp.isfinite(logits))) and bool(jnp.all(att >= 0.0))
    assert bool(jnp.allclose(logits, _ref_forward(params, x), rtol=5e-2, atol=5e-2))
    assert bool(jnp.allclose(att, _ref_attention(params, x, mask), rtol=5e-2, atol=5e-2))

    # secondary test: odd spatial size + batch=1 exercises the cdiv grid with a
    # masked partial last tile and the 2-way spatial-reduction split.
    x2 = jax.random.normal(kx2, (1, 3, 18, 18), F32)
    logits2 = jax.block_until_ready(forward(params, x2))
    assert logits2.shape == (1, NUM_CLASSES)
    assert bool(jnp.allclose(logits2, _ref_forward(params, x2), rtol=5e-2, atol=5e-2))

    print("KERNEL_OK")
</pallas_src>

<mosaic_0001>
module attributes {stable_mosaic.version = 11 : i64} {
  func.func @_classifier_kernel(%arg0: i32, %arg1: memref<1x2x8x960xf32, #tpu.memory_space<vmem>>, %arg2: memref<960x128xf32, #tpu.memory_space<vmem>>, %arg3: memref<1x128xf32, #tpu.memory_space<vmem>>, %arg4: memref<1x8x128xf32, #tpu.memory_space<vmem>>) attributes {dimension_semantics = [#tpu.dimension_semantics<parallel>], iteration_bounds = array<i64: 2>, scalar_prefetch = 0 : i64, scratch_operands = 0 : i64, tpu.core_type = #tpu.core_type<tc>, window_params = [{transform_indices = @transform_0, window_bounds = array<i64: 1, 2, 8, 960>}, {pipeline_mode = #tpu.pipeline_mode<synchronous>, transform_indices = @transform_1, window_bounds = array<i64: 960, 128>}, {pipeline_mode = #tpu.pipeline_mode<synchronous>, transform_indices = @transform_2, window_bounds = array<i64: 1, 128>}, {transform_indices = @transform_3, window_bounds = array<i64: 1, 8, 128>}]} {
    %c0 = arith.constant 0 : index
    %c0_0 = arith.constant 0 : index
    %c0_1 = arith.constant 0 : index
    %c0_2 = arith.constant 0 : index
    %0 = vector.load %arg1[%c0, %c0_0, %c0_1, %c0_2] : memref<1x2x8x960xf32, #tpu.memory_space<vmem>>, vector<1x2x8x960xf32>
    %1 = vector.shape_cast %0 : vector<1x2x8x960xf32> to vector<2x8x960xf32>
    %cst = arith.constant dense<0.000000e+00> : vector<8x960xf32>
    %2 = vector.multi_reduction <add>, %1, %cst [0] : vector<2x8x960xf32> to vector<8x960xf32>
    %cst_3 = arith.constant dense<0.000000e+00> : vector<960xf32>
    %3 = vector.multi_reduction <add>, %2, %cst_3 [0] : vector<8x960xf32> to vector<960xf32>
    %4 = vector.shape_cast %3 : vector<960xf32> to vector<1x960xf32>
    %cst_4 = arith.constant 1.562500e-02 : f32
    %5 = vector.broadcast %cst_4 : f32 to vector<1x960xf32>
    %6 = arith.mulf %4, %5 : vector<1x960xf32>
    %c0_5 = arith.constant 0 : index
    %c0_6 = arith.constant 0 : index
    %7 = vector.load %arg2[%c0_5, %c0_6] : memref<960x128xf32, #tpu.memory_space<vmem>>, vector<960x128xf32>
    %cst_7 = arith.constant dense<0.000000e+00> : vector<1x128xf32>
    %8 = tpu.matmul %6, %7, %cst_7 {dimension_numbers = #tpu.dot_dimension_numbers<[1], [0], [0], [1], [0, 0, 1, 1], [], []>} : vector<1x960xf32>, vector<960x128xf32>, vector<1x128xf32> -> vector<1x128xf32>
    %c0_8 = arith.constant 0 : index
    %c0_9 = arith.constant 0 : index
    %9 = vector.load %arg3[%c0_8, %c0_9] : memref<1x128xf32, #tpu.memory_space<vmem>>, vector<1x128xf32>
    %10 = arith.addf %8, %9 : vector<1x128xf32>
    %11 = vector.shape_cast %10 : vector<1x128xf32> to vector<1x128xf32>
    %12 = vector.broadcast %11 : vector<1x128xf32> to vector<8x128xf32>
    %c0_10 = arith.constant 0 : index
    %c0_11 = arith.constant 0 : index
    %c0_12 = arith.constant 0 : index
    %13 = vector.load %arg4[%c0_10, %c0_11, %c0_12] : memref<1x8x128xf32, #tpu.memory_space<vmem>>, vector<1x8x128xf32>
    %14 = vector.shape_cast %13 : vector<1x8x128xf32> to vector<8x128xf32>
    %15 = vector.shape_cast %12 : vector<8x128xf32> to vector<1x8x128xf32>
    tpu.vector_store %arg4[%c0_10, %c0_11, %c0_12], %15 {strides = array<i32>} : memref<1x8x128xf32, #tpu.memory_space<vmem>>, vector<1x8x128xf32>,
    return
  }
  func.func @transform_0(%arg0: i32) -> (i32, i32, i32, i32) {
    %c0_i32 = arith.constant 0 : i32
    %c0_i32_0 = arith.constant 0 : i32
    %c0_i32_1 = arith.constant 0 : i32
    %c0_i32_2 = arith.constant 0 : i32
    return %arg0, %c0_i32, %c0_i32_0, %c0_i32_1 : i32, i32, i32, i32
  }
  func.func @transform_1(%arg0: i32) -> (i32, i32) {
    %c0_i32 = arith.constant 0 : i32
    %c0_i32_0 = arith.constant 0 : i32
    %c0_i32_1 = arith.constant 0 : i32
    return %c0_i32, %c0_i32_0 : i32, i32
  }
  func.func @transform_2(%arg0: i32) -> (i32, i32) {
    %c0_i32 = arith.constant 0 : i32
    %c0_i32_0 = arith.constant 0 : i32
    %c0_i32_1 = arith.constant 0 : i32
    return %c0_i32, %c0_i32_0 : i32, i32
  }
  func.func @transform_3(%arg0: i32) -> (i32, i32, i32) {
    %c0_i32 = arith.constant 0 : i32
    %c0_i32_0 = arith.constant 0 : i32
    %c0_i32_1 = arith.constant 0 : i32
    return %arg0, %c0_i32, %c0_i32_0 : i32, i32, i32
  }
}

module attributes {stable_mosaic.version = 11 : i64} {
  func.func @_feature_pool_kernel(%arg0: i32, %arg1: i32, %arg2: i32, %arg3: memref<1x32x27xbf16, #tpu.memory_space<vmem>>, %arg4: memref<27x16xbf16, #tpu.memory_space<vmem>>, %arg5: memref<1x16xf32, #tpu.memory_space<vmem>>, %arg6: memref<16x960xbf16, #tpu.memory_space<vmem>>, %arg7: memref<1x1x8x960xf32, #tpu.memory_space<vmem>>, %arg8: memref<8x960xf32, #tpu.memory_space<vmem>>) attributes {dimension_semantics = [#tpu.dimension_semantics<parallel>, #tpu.dimension_semantics<parallel>, #tpu.dimension_semantics<arbitrary>], iteration_bounds = array<i64: 2, 2, 1>, scalar_prefetch = 0 : i64, scratch_operands = 1 : i64, tpu.core_type = #tpu.core_type<tc>, window_params = [{transform_indices = @transform_0, window_bounds = array<i64: 1, 32, 27>}, {pipeline_mode = #tpu.pipeline_mode<synchronous>, transform_indices = @transform_1, window_bounds = array<i64: 27, 16>}, {pipeline_mode = #tpu.pipeline_mode<synchronous>, transform_indices = @transform_2, window_bounds = array<i64: 1, 16>}, {pipeline_mode = #tpu.pipeline_mode<synchronous>, transform_indices = @transform_3, window_bounds = array<i64: 16, 960>}, {transform_indices = @transform_4, window_bounds = array<i64: 1, 1, 8, 960>}]} {
    %c0_i32 = arith.constant 0 : i32
    %0 = arith.cmpi eq, %arg2, %c0_i32 : i32
    %1 = arith.extui %0 : i1 to i32
    %c0_i32_0 = arith.constant 0 : i32
    %2 = arith.cmpi ne, %1, %c0_i32_0 : i32
    scf.if %2 {
      %cst_23 = arith.constant 0.000000e+00 : f32
      %43 = vector.broadcast %cst_23 : f32 to vector<8x960xf32>
      %c0_24 = arith.constant 0 : index
      %c0_25 = arith.constant 0 : index
      %44 = vector.load %arg8[%c0_24, %c0_25] : memref<8x960xf32, #tpu.memory_space<vmem>>, vector<8x960xf32>
      tpu.vector_store %arg8[%c0_24, %c0_25], %43 {strides = array<i32>} : memref<8x960xf32, #tpu.memory_space<vmem>>, vector<8x960xf32>,
    } else {
    }
    %c0 = arith.constant 0 : index
    %c0_1 = arith.constant 0 : index
    %c0_2 = arith.constant 0 : index
    %3 = vector.load %arg3[%c0, %c0_1, %c0_2] : memref<1x32x27xbf16, #tpu.memory_space<vmem>>, vector<1x32x27xbf16>
    %4 = vector.shape_cast %3 : vector<1x32x27xbf16> to vector<32x27xbf16>
    %c0_3 = arith.constant 0 : index
    %c0_4 = arith.constant 0 : index
    %5 = vector.load %arg4[%c0_3, %c0_4] : memref<27x16xbf16, #tpu.memory_space<vmem>>, vector<27x16xbf16>
    %cst = arith.constant dense<0.000000e+00> : vector<32x16xf32>
    %6 = tpu.matmul %4, %5, %cst {dimension_numbers = #tpu.dot_dimension_numbers<[1], [0], [0], [1], [0, 0, 1, 1], [], []>} : vector<32x27xbf16>, vector<27x16xbf16>, vector<32x16xf32> -> vector<32x16xf32>
    %c0_5 = arith.constant 0 : index
    %c0_6 = arith.constant 0 : index
    %7 = vector.load %arg5[%c0_5, %c0_6] : memref<1x16xf32, #tpu.memory_space<vmem>>, vector<1x16xf32>
    %8 = vector.broadcast %7 : vector<1x16xf32> to vector<32x16xf32>
    %9 = arith.addf %6, %8 : vector<32x16xf32>
    %cst_7 = arith.constant 3.000000e+00 : f32
    %10 = vector.broadcast %cst_7 : f32 to vector<32x16xf32>
    %11 = arith.addf %9, %10 : vector<32x16xf32>
    %cst_8 = arith.constant 0.000000e+00 : f32
    %cst_9 = arith.constant 6.000000e+00 : f32
    %12 = vector.broadcast %cst_8 : f32 to vector<32x16xf32>
    %13 = arith.maximumf %12, %11 : vector<32x16xf32>
    %14 = vector.broadcast %cst_9 : f32 to vector<32x16xf32>
    %15 = arith.minimumf %14, %13 : vector<32x16xf32>
    %16 = arith.mulf %9, %15 : vector<32x16xf32>
    %cst_10 = arith.constant 0.166666672 : f32
    %17 = vector.broadcast %cst_10 : f32 to vector<32x16xf32>
    %18 = arith.mulf %16, %17 : vector<32x16xf32>
    %19 = arith.truncf %18 : vector<32x16xf32> to vector<32x16xbf16>
    %c0_11 = arith.constant 0 : index
    %c0_12 = arith.constant 0 : index
    %20 = vector.load %arg6[%c0_11, %c0_12] : memref<16x960xbf16, #tpu.memory_space<vmem>>, vector<16x960xbf16>
    %cst_13 = arith.constant dense<0.000000e+00> : vector<32x960xf32>
    %21 = tpu.matmul %19, %20, %cst_13 {dimension_numbers = #tpu.dot_dimension_numbers<[1], [0], [0], [1], [0, 0, 1, 1], [], []>} : vector<32x16xbf16>, vector<16x960xbf16>, vector<32x960xf32> -> vector<32x960xf32>
    %cst_14 = arith.constant 0.000000e+00 : f32
    %22 = vector.broadcast %cst_14 : f32 to vector<32x960xf32>
    %23 = arith.maximumf %21, %22 : vector<32x960xf32>
    %c1_i32 = arith.constant 1 : i32
    %24 = arith.muli %arg1, %c1_i32 : i32
    %25 = arith.addi %24, %arg2 : i32
    %c32_i32 = arith.constant 32 : i32
    %26 = arith.muli %25, %c32_i32 : i32
    %c64_i32 = arith.constant 64 : i32
    %27 = arith.subi %c64_i32, %26 : i32
    %28 = tpu.iota {dimensions = array<i32: 0>} : vector<32x1xi32>
    %29 = vector.broadcast %27 : i32 to vector<32x1xi32>
    %30 = arith.cmpi slt, %28, %29 : vector<32x1xi32>
    %cst_15 = arith.constant 0.000000e+00 : f32
    %31 = vector.shape_cast %30 : vector<32x1xi1> to vector<32x1xi1>
    %32 = vector.broadcast %31 : vector<32x1xi1> to vector<32x960xi1>
    %33 = vector.broadcast %cst_15 : f32 to vector<32x960xf32>
    %34 = arith.select %32, %23, %33 : vector<32x960xi1>, vector<32x960xf32>
    %c0_16 = arith.constant 0 : index
    %c0_17 = arith.constant 0 : index
    %35 = vector.load %arg8[%c0_16, %c0_17] : memref<8x960xf32, #tpu.memory_space<vmem>>, vector<8x960xf32>
    %36 = vector.shape_cast %34 : vector<32x960xf32> to vector<4x8x960xf32>
    %cst_18 = arith.constant dense<0.000000e+00> : vector<8x960xf32>
    %37 = vector.multi_reduction <add>, %36, %cst_18 [0] : vector<4x8x960xf32> to vector<8x960xf32>
    %38 = arith.addf %35, %37 : vector<8x960xf32>
    %c0_19 = arith.constant 0 : index
    %c0_20 = arith.constant 0 : index
    %39 = vector.load %arg8[%c0_19, %c0_20] : memref<8x960xf32, #tpu.memory_space<vmem>>, vector<8x960xf32>
    tpu.vector_store %arg8[%c0_19, %c0_20], %38 {strides = array<i32>} : memref<8x960xf32, #tpu.memory_space<vmem>>, vector<8x960xf32>,
    %c0_i32_21 = arith.constant 0 : i32
    %40 = arith.cmpi eq, %arg2, %c0_i32_21 : i32
    %41 = arith.extui %40 : i1 to i32
    %c0_i32_22 = arith.constant 0 : i32
    %42 = arith.cmpi ne, %41, %c0_i32_22 : i32
    scf.if %42 {
      %c0_23 = arith.constant 0 : index
      %c0_24 = arith.constant 0 : index
      %43 = vector.load %arg8[%c0_23, %c0_24] : memref<8x960xf32, #tpu.memory_space<vmem>>, vector<8x960xf32>
      %c0_25 = arith.constant 0 : index
      %c0_26 = arith.constant 0 : index
      %c0_27 = arith.constant 0 : index
      %c0_28 = arith.constant 0 : index
      %44 = vector.load %arg7[%c0_25, %c0_26, %c0_27, %c0_28] : memref<1x1x8x960xf32, #tpu.memory_space<vmem>>, vector<1x1x8x960xf32>
      %45 = vector.shape_cast %44 : vector<1x1x8x960xf32> to vector<8x960xf32>
      %46 = vector.shape_cast %43 : vector<8x960xf32> to vector<1x1x8x960xf32>
      tpu.vector_store %arg7[%c0_25, %c0_26, %c0_27, %c0_28], %46 {strides = array<i32>} : memref<1x1x8x960xf32, #tpu.memory_space<vmem>>, vector<1x1x8x960xf32>,
    } else {
    }
    return
  }
  func.func @transform_0(%arg0: i32, %arg1: i32, %arg2: i32) -> (i32, i32, i32) {
    %c1_i32 = arith.constant 1 : i32
    %0 = arith.muli %arg1, %c1_i32 : i32
    %1 = arith.addi %0, %arg2 : i32
    %c0_i32 = arith.constant 0 : i32
    %c0_i32_0 = arith.constant 0 : i32
    return %arg0, %1, %c0_i32 : i32, i32, i32
  }
  func.func @transform_1(%arg0: i32, %arg1: i32, %arg2: i32) -> (i32, i32) {
    %c0_i32 = arith.constant 0 : i32
    %c0_i32_0 = arith.constant 0 : i32
    %c0_i32_1 = arith.constant 0 : i32
    return %c0_i32, %c0_i32_0 : i32, i32
  }
  func.func @transform_2(%arg0: i32, %arg1: i32, %arg2: i32) -> (i32, i32) {
    %c0_i32 = arith.constant 0 : i32
    %c0_i32_0 = arith.constant 0 : i32
    %c0_i32_1 = arith.constant 0 : i32
    return %c0_i32, %c0_i32_0 : i32, i32
  }
  func.func @transform_3(%arg0: i32, %arg1: i32, %arg2: i32) -> (i32, i32) {
    %c0_i32 = arith.constant 0 : i32
    %c0_i32_0 = arith.constant 0 : i32
    %c0_i32_1 = arith.constant 0 : i32
    return %c0_i32, %c0_i32_0 : i32, i32
  }
  func.func @transform_4(%arg0: i32, %arg1: i32, %arg2: i32) -> (i32, i32, i32, i32) {
    %c0_i32 = arith.constant 0 : i32
    %c0_i32_0 = arith.constant 0 : i32
    %c0_i32_1 = arith.constant 0 : i32
    return %arg0, %arg1, %c0_i32, %c0_i32_0 : i32, i32, i32, i32
  }
}

</mosaic_0001>

<llo_original>
// kernel: _forward_impl.2
$region0: #{_forward_impl.2}
  #allocation0 [shape = 'u32[]', space=smem, size = 0x4, offset = 0x4, fixed_abs, tag = 'smem constant byte address 0x4 - core index']
  #allocation1 [shape = 'u32[144,128]{1,0:T(1,128)}', space=vmem, size = 0x12000, scoped, tag = 'internal scratch']
  #allocation2 [shape = 'f32[8,960]{1,0:T(8,128)}', space=vmem, size = 0x8000, scoped, tag = 'scratch operand']
  %s0 = inlined_call_operand.vmem [shape: bf16[2,64,27], index: 0, kind: input, shape index: {}]
  %s1 = inlined_call_operand.vmem [shape: bf16[27,16], index: 1, kind: input, shape index: {}]
  %s2 = inlined_call_operand.vmem [shape: f32[1,16], index: 2, kind: input, shape index: {}]
  %s3 = inlined_call_operand.vmem [shape: bf16[16,960], index: 3, kind: input, shape index: {}]
  %s4 = inlined_call_operand.vmem [shape: f32[2,2,8,960], index: 4, kind: output, shape index: {}]
  %s5 = sld [smem:[#allocation0]]
  $region57: #{_forward_impl.2} parent=0
    _
  %s7 = ssub.s32 1, %s5
  %s8 = scalar_select 0, %s7, %s5
  loop: start=0, step=1, limit=6
  $region2: #{_forward_impl.2} parent=0 // loop_pre_header
    _
  $region3: #{_forward_impl.2} parent=0 // loop_header
    %s10 = sphi 0, %s14
    %p11 = scmp.ge.s32.totalorder %s10, 6
    %s17 = sphi 0, %s36
    %s18 = sphi 0, %s32
    %s19 = sphi 0, %s28
    %s20 = sphi 0, %s17
    %s21 = sphi 0, %s18
    %s22 = sphi 0, %s19
    %s23 = sphi 0, %s20
    %s24 = sphi 0, %s21
    %s25 = sphi 0, %s22
    %s43 = sphi 0, %s45
    %s46 = sphi 0, %s43
    %s47 = sphi 0, %s46
    %s63 = sphi 0, %s47
    %s67 = sphi 0, %s67
    %s69 = sphi 0, %s67
    %s70 = sphi 0, %s69
    %s84 = sphi 0, %s70
    %s88 = sphi 0, %s88
    %s90 = sphi 0, %s88
    %s91 = sphi 0, %s90
    %s105 = sphi 0, %s91
    %s109 = sphi 0, %s109
    %s111 = sphi 0, %s109
    %s112 = sphi 0, %s111
    %s126 = sphi 0, %s112
    %s134 = sphi 0, %s136
    %s137 = sphi 0, %s134
    %s138 = sphi 0, %s137
    %s154 = sphi 0, %s138
  $region4: #{_forward_impl.2} parent=0 // loop_header_branch
    %13 = sbr.rel (%p11) target = $region8
  $region5: #{_forward_impl.2} parent=0 // loop_body
    %s15 = ssub.s32 %s10, 1
    %s16 = ssub.s32 %s10, 2
    %s26 = sadd.s32 1, %s19
    %p27 = scmp.ge.s32.totalorder %s26, 1
    %s28 = scalar_select %p27, 0, %s26
    %s29 = sadd.s32 1, %s18
    %s30 = scalar_select %p27, %s29, %s18
    %p31 = scmp.ge.s32.totalorder %s30, 2
    %s32 = scalar_select %p31, 0, %s30
    %s33 = sadd.s32 1, %s17
    %s34 = scalar_select %p31, %s33, %s17
    %p35 = scmp.ge.s32.totalorder %s34, 2
    %s36 = scalar_select %p35, 0, %s34
    %s37 = sadd.s32 %s18, %s19
    %s38 = sadd.s32 %s32, %s28
    %s39 = ssub.s32 %s17, %s36
    %s40 = ssub.s32 %s37, %s38
    %s41 = sor.u32 %s39, %s40
    %p42 = scmp.eq.s32.totalorder %s41, 0
    %s44 = sadd.s32 %s43, 1
    %s45 = scalar_select %p42, %s43, %s44
    %p48 = pneg %p42
    %p49 = scmp.eq.s32.totalorder %s10, 3
    %p50 = por %p48, %p49
    %p51 = scmp.ne.s32.totalorder %s43, %s46
    %p52 = scmp.eq.s32.totalorder %s10, 0
    %p53 = por %p51, %p52
    %p54 = scmp.ne.s32.totalorder %s43, %s46
    %p55 = scmp.eq.s32.totalorder %s15, 3
    %p56 = por %p54, %p55
    %p57 = scmp.ne.s32.totalorder %s46, %s47
    %p58 = scmp.eq.s32.totalorder %s15, 0
    %p59 = por %p57, %p58
    %p60 = scmp.ne.s32.totalorder %s46, %s47
    %p61 = scmp.eq.s32.totalorder %s16, 3
    %p62 = por %p60, %p61
    %p64 = scmp.ne.s32.totalorder %s47, %s63
    %p65 = scmp.eq.s32.totalorder %s16, 0
    %p66 = por %p64, %p65
    %s68 = sadd.s32 %s67, 1
    %p71 = scmp.eq.s32.totalorder %s10, 3
    %p72 = scmp.ne.s32.totalorder %s67, %s69
    %p73 = scmp.eq.s32.totalorder %s10, 0
    %p74 = por %p72, %p73
    %p75 = scmp.ne.s32.totalorder %s67, %s69
    %p76 = scmp.eq.s32.totalorder %s15, 3
    %p77 = por %p75, %p76
    %p78 = scmp.ne.s32.totalorder %s69, %s70
    %p79 = scmp.eq.s32.totalorder %s15, 0
    %p80 = por %p78, %p79
    %p81 = scmp.ne.s32.totalorder %s69, %s70
    %p82 = scmp.eq.s32.totalorder %s16, 3
    %p83 = por %p81, %p82
    %p85 = scmp.ne.s32.totalorder %s70, %s84
    %p86 = scmp.eq.s32.totalorder %s16, 0
    %p87 = por %p85, %p86
    %s89 = sadd.s32 %s88, 1
    %p92 = scmp.eq.s32.totalorder %s10, 3
    %p93 = scmp.ne.s32.totalorder %s88, %s90
    %p94 = scmp.eq.s32.totalorder %s10, 0
    %p95 = por %p93, %p94
    %p96 = scmp.ne.s32.totalorder %s88, %s90
    %p97 = scmp.eq.s32.totalorder %s15, 3
    %p98 = por %p96, %p97
    %p99 = scmp.ne.s32.totalorder %s90, %s91
    %p100 = scmp.eq.s32.totalorder %s15, 0
    %p101 = por %p99, %p100
    %p102 = scmp.ne.s32.totalorder %s90, %s91
    %p103 = scmp.eq.s32.totalorder %s16, 3
    %p104 = por %p102, %p103
    %p106 = scmp.ne.s32.totalorder %s91, %s105
    %p107 = scmp.eq.s32.totalorder %s16, 0
    %p108 = por %p106, %p107
    %s110 = sadd.s32 %s109, 1
    %p113 = scmp.eq.s32.totalorder %s10, 3
    %p114 = scmp.ne.s32.totalorder %s109, %s111
    %p115 = scmp.eq.s32.totalorder %s10, 0
    %p116 = por %p114, %p115
    %p117 = scmp.ne.s32.totalorder %s109, %s111
    %p118 = scmp.eq.s32.totalorder %s15, 3
    %p119 = por %p117, %p118
    %p120 = scmp.ne.s32.totalorder %s111, %s112
    %p121 = scmp.eq.s32.totalorder %s15, 0
    %p122 = por %p120, %p121
    %p123 = scmp.ne.s32.totalorder %s111, %s112
    %p124 = scmp.eq.s32.totalorder %s16, 3
    %p125 = por %p123, %p124
    %p127 = scmp.ne.s32.totalorder %s112, %s126
    %p128 = scmp.eq.s32.totalorder %s16, 0
    %p129 = por %p127, %p128
    %s130 = ssub.s32 %s17, %s36
    %s131 = ssub.s32 %s18, %s32
    %s132 = sor.u32 %s130, %s131
    %p133 = scmp.eq.s32.totalorder %s132, 0
    %s135 = sadd.s32 %s134, 1
    %s136 = scalar_select %p133, %s134, %s135
    %p139 = pneg %p133
    %p140 = scmp.eq.s32.totalorder %s10, 3
    %p141 = por %p139, %p140
    %p142 = scmp.ne.s32.totalorder %s134, %s137
    %p143 = scmp.eq.s32.totalorder %s10, 0
    %p144 = por %p142, %p143
    %p145 = scmp.ne.s32.totalorder %s134, %s137
    %p146 = scmp.eq.s32.totalorder %s15, 3
    %p147 = por %p145, %p146
    %p148 = scmp.ne.s32.totalorder %s137, %s138
    %p149 = scmp.eq.s32.totalorder %s15, 0
    %p150 = por %p148, %p149
    %p151 = scmp.ne.s32.totalorder %s137, %s138
    %p152 = scmp.eq.s32.totalorder %s16, 3
    %p153 = por %p151, %p152
    %p155 = scmp.ne.s32.totalorder %s138, %s154
    %p156 = scmp.eq.s32.totalorder %s16, 0
    %p157 = por %p155, %p156
    %p158 = scmp.le.s32.totalorder 1, %s10
    %p159 = scmp.lt.s32.totalorder %s10, 5
    %p160 = pnand %p158, %p159
    %p161 = pneg %p160
    // Predicated region
    $region9: #{_forward_impl.2} parent=5 // pred_check
      _
    $region10: #{_forward_impl.2} parent=5 // pred_check_branch
      %163 = sbr.rel (%p160) target = $region12
    $region11: #{_forward_impl.2} parent=5 // pred_region
      %s164 = ssub.s32 %s10, 1
      // Predicated region
      $region13: #{_forward_impl.2} parent=11 // pred_check
        %p165 = pneg %p80
      $region14: #{_forward_impl.2} parent=11 // pred_check_branch
        %167 = sbr.rel (%p165) target = $region16
      $region15: #{_forward_impl.2} parent=11 // pred_region
        _
      $region16: #{_forward_impl.2} parent=11 // pred_fallthru
        _
      // Predicated region
      $region17: #{_forward_impl.2} parent=11 // pred_check
        %p168 = pneg %p101
      $region18: #{_forward_impl.2} parent=11 // pred_check_branch
        %170 = sbr.rel (%p168) target = $region20
      $region19: #{_forward_impl.2} parent=11 // pred_region
        _
      $region20: #{_forward_impl.2} parent=11 // pred_fallthru
        _
      // Predicated region
      $region21: #{_forward_impl.2} parent=11 // pred_check
        %p171 = pneg %p122
      $region22: #{_forward_impl.2} parent=11 // pred_check_branch
        %173 = sbr.rel (%p171) target = $region24
      $region23: #{_forward_impl.2} parent=11 // pred_region
        _
      $region24: #{_forward_impl.2} parent=11 // pred_fallthru
        _
    $region12: #{_forward_impl.2} parent=5 // pred_fallthru
      _
    %p174 = scmp.lt.s32.totalorder %s10, 4
    // Predicated region
    $region25: #{_forward_impl.2} parent=5 // pred_check
      %p175 = pneg %p174
    $region26: #{_forward_impl.2} parent=5 // pred_check_branch
      %177 = sbr.rel (%p175) target = $region28
    $region27: #{_forward_impl.2} parent=5 // pred_region
      // Predicated region
      $region29: #{_forward_impl.2} parent=27 // pred_check
        %p178 = pneg %p53
      $region30: #{_forward_impl.2} parent=27 // pred_check_branch
        %180 = sbr.rel (%p178) target = $region32
      $region31: #{_forward_impl.2} parent=27 // pred_region
        %s181 = sadd.s32 %s18, %s19
        %s182 = smul.u32 4, %s181
        %p183 = scmp.lt.s32.totalorder %s17, 1
        %s184 = scalar_select %p183, %s17, 1
        %p185 = scmp.lt.s32.totalorder %s182, 7
        %s186 = scalar_select %p185, %s182, 7
        %s187 = smul.addr %s184, 8
        %s188 = sadd.s32 %s186, %s187
        %s189 = smul.addr %s188, 4
        %s190 = scalar_lea.vmem %s0, %s189
        %s191 = sadd.s32 %s18, %s19
        %s192 = smul.u32 4, %s191
      $region32: #{_forward_impl.2} parent=27 // pred_fallthru
        _
    $region28: #{_forward_impl.2} parent=5 // pred_fallthru
      _
    %p193 = scmp.le.s32.totalorder 1, %s10
    %p194 = scmp.lt.s32.totalorder %s10, 5
    %p195 = pnand %p193, %p194
    %p196 = pneg %p195
    // Predicated region
    $region33: #{_forward_impl.2} parent=5 // pred_check
      _
    $region34: #{_forward_impl.2} parent=5 // pred_check_branch
      %198 = sbr.rel (%p195) target = $region36
    $region35: #{_forward_impl.2} parent=5 // pred_region
      %s199 = ssub.s32 %s10, 1
      %s200 = sadd.s32 %s21, %s22
      %s201 = smul.u32 4, %s200
      %p202 = scmp.lt.s32.totalorder %s20, 1
      %s203 = scalar_select %p202, %s20, 1
      %p204 = scmp.lt.s32.totalorder %s201, 7
      %s205 = scalar_select %p204, %s201, 7
      %s206 = smul.addr %s203, 8
      %s207 = sadd.s32 %s205, %s206
      %s208 = smul.addr %s207, 4
      %s209 = scalar_lea.vmem %s0, %s208
      %p210 = pneg %p59
      %p211 = pneg %p56
      %p212 = pneg %p80
      %p213 = pneg %p77
      %p214 = pneg %p101
      %p215 = pneg %p98
      %p216 = pneg %p122
      %p217 = pneg %p119
      %p218 = pneg %p150
      %p219 = pneg %p147
      %p220 = scmp.lt.s32.totalorder %s20, 1
      %s221 = scalar_select %p220, %s20, 1
      %p222 = scmp.lt.s32.totalorder %s21, 1
      %s223 = scalar_select %p222, %s21, 1
      %s224 = smul.addr %s223, 8
      %s225 = smul.addr %s221, 16
      %s226 = sadd.s32 %s224, %s225
      %s227 = smul.addr %s226, 8
      %s228 = scalar_lea.vmem %s4, %s227
      %s229 = sadd.s32 %s21, %s22
      %s230 = smul.u32 4, %s229
      %p231 = scmp.lt.s32.totalorder %s20, 1
      %s232 = scalar_select %p231, %s20, 1
      %p233 = scmp.lt.s32.totalorder %s230, 7
      %s234 = scalar_select %p233, %s230, 7
      %s235 = smul.addr %s232, 8
      %s236 = sadd.s32 %s234, %s235
      %s237 = smul.addr %s236, 4
      %s238 = scalar_lea.vmem %s0, %s237
      %s239 = sadd.s32 %s21, %s22
      %s240 = smul.u32 4, %s239
      %p241 = scmp.lt.s32.totalorder %s20, 1
      %s242 = scalar_select %p241, %s20, 1
      %p243 = scmp.lt.s32.totalorder %s21, 1
      %s244 = scalar_select %p243, %s21, 1
      %s245 = smul.addr %s244, 8
      %s246 = smul.addr %s242, 16
      %s247 = sadd.s32 %s245, %s246
      %s248 = smul.addr %s247, 8
      %s249 = scalar_lea.vmem %s4, %s248
      %p251 = scmp.eq.s32.totalorder %s22, 0
      // Predicated region
      $region37: #{_forward_impl.2} parent=35 // pred_check
        %p252 = pneg %p251
      $region38: #{_forward_impl.2} parent=35 // pred_check_branch
        %254 = sbr.rel (%p252) target = $region40
      $region39: #{_forward_impl.2} parent=35 // pred_region
        %255 = vst [vmem:[#allocation2] sm:$0xff] 0.0
        %256 = vst [vmem:[#allocation2 + $0x8] sm:$0xff] 0.0
        %257 = vst [vmem:[#allocation2 + $0x10] sm:$0xff] 0.0
        %258 = vst [vmem:[#allocation2 + $0x18] sm:$0xff] 0.0
        %259 = vst [vmem:[#allocation2 + $0x20] sm:$0xff] 0.0
        %260 = vst [vmem:[#allocation2 + $0x28] sm:$0xff] 0.0
        %261 = vst [vmem:[#allocation2 + $0x30] sm:$0xff] 0.0
        %vm262 = vcmask 523264
        %263 = vst.msk [vmem:[#allocation2 + $0x38] sm:$0xff] %vm262, 0.0
      $region40: #{_forward_impl.2} parent=35 // pred_fallthru
        _
      %v264 = vld [vmem:[%s238] sm:$0xf]
      %v265 = vld [vmem:[%s238 + $0x4] sm:$0xf]
      %v266 = vld [vmem:[%s238 + $0x8] sm:$0xf]
      %v267 = vld [vmem:[%s238 + $0xc] sm:$0xf]
      %v268 = vld [vmem:[%s1] sm:$0xf]
      %v269 = vld [vmem:[%s1 + $0x4] sm:$0xf]
      %v270 = vld [vmem:[%s1 + $0x8] sm:$0xf]
      %v271 = vld [vmem:[%s1 + $0xc] sm:$0x3]
      %v272 = vld [vmem:[%s2] sm:$0x1]
      %v274 = vlaneseq
      %v275 = vshrl.u32 %v274, 7
      %v276 = vsub.s32 0, %v275
      %v277 = vrot.slane %v272, %v276
      %v283 = vunpack.c.l.b16 %v264
      %v284 = vunpack.c.l.b16 %v265
      %v285 = vunpack.c.l.b16 %v266
      %v286 = vunpack.c.l.b16 %v267
      %v287 = vpack.c.b16 %v284, %v283
      %v288 = vpack.c.b16 %v286, %v285
      %v293 = vunpack.c.l.b16 %v268
      %v294 = vunpack.c.l.b16 %v269
      %v295 = vunpack.c.l.b16 %v270
      %v296 = vunpack.c.l.b16 %v271
      %v297 = vpack.c.b16 %v294, %v293
      %v298 = vpack.c.b16 %v296, %v295
      %vm300 = vcmask 220160
      %v302 = vsel %vm300, %v287, 0
      %v305 = vsel %vm300, %v288, 0
      %vm307 = vcmask 1044480
      %vm308 = vcmask 1045504
      %v309 = vsel %vm307, 4294967295, 65535
      %v310 = vsel %vm308, %v309, 0
      %v312 = vand.u32 %v298, %v310
      %314 = vmatprep.subr.bf16.mxu0 0
      %315 = vmatpush1.bf16.msra.mxu0 0
      %316 = vmatprep.subr.bf16.mxu0 0
      %317 = vmatpush1.bf16.msra.mxu0 0
      %318 = vmatprep.subr.bf16.mxu0 0
      %319 = vmatpush1.bf16.msra.mxu0 0
      %320 = vmatprep.subr.bf16.mxu0 0
      %321 = vmatpush1.bf16.msra.mxu0 0
      %322 = vmatprep.subr.bf16.mxu0 0
      %323 = vmatpush1.bf16.msra.mxu0 0
      %324 = vmatprep.subr.bf16.mxu0 0
      %325 = vmatpush1.bf16.msra.mxu0 0
      %326 = vmatprep.subr.bf16.mxu0 0
      %327 = vmatpush1.bf16.msra.mxu0 %v312
      %328 = vmatprep.subr.bf16.mxu0 0
      %329 = vmatpush1.bf16.msra.mxu0 %v297
      %330 = vmatprep.subr.bf16.mxu0 0
      %331 = vmatpush2.bf16.msra.mxu0 0
      %332 = vmatprep.subr.bf16.mxu0 0
      %333 = vmatpush2.bf16.msra.mxu0 0
      %334 = vmatprep.subr.bf16.mxu0 0
      %335 = vmatpush2.bf16.msra.mxu0 0
      %336 = vmatprep.subr.bf16.mxu0 0
      %337 = vmatpush2.bf16.msra.mxu0 0
      %338 = vmatprep.subr.bf16.mxu0 0
      %339 = vmatpush2.bf16.msra.mxu0 0
      %340 = vmatprep.subr.bf16.mxu0 0
      %341 = vmatpush2.bf16.msra.mxu0 0
      %342 = vmatprep.subr.bf16.mxu0 0
      %343 = vmatpush2.bf16.msra.mxu0 0
      %344 = vmatprep.subr.bf16.mxu0 0
      %345 = vmatpush2.bf16.msra.mxu0 0
      %346 = vmatprep.mubr.bf16.mxu0 0
      %347 = vmatmul.mubr.bf16.gmra.mxu0 %v302
      %v348 = vpop.f32.mrf.mxu0
      %v349 = vadd.f32 %v277, %v348
      %v350 = vpop.f32.mrf.mxu0
      %v351 = vpop.f32.mrf.mxu0
      %v352 = vadd.f32 %v277, %v351
      %v353 = vpop.f32.mrf.mxu0
      %354 = vmatprep.mubr.bf16.mxu0 0
      %355 = vmatmul.mubr.bf16.gmra.mxu0 %v305
      %v356 = vpop.f32.mrf.mxu0
      %v357 = vadd.f32 %v277, %v356
      %v358 = vpop.f32.mrf.mxu0
      %v359 = vpop.f32.mrf.mxu0
      %v360 = vadd.f32 %v277, %v359
      %v361 = vpop.f32.mrf.mxu0
      %362 = vdwg.mxu0
      %v363 = vadd.f32 %v349, 3.0
      %v364 = vadd.f32 %v352, 3.0
      %v365 = vadd.f32 %v357, 3.0
      %v366 = vadd.f32 %v360, 3.0
      %v367 = vmax.f32 %v363, 0.0
      %v368 = vmax.f32 %v364, 0.0
      %v369 = vmax.f32 %v365, 0.0
      %v370 = vmax.f32 %v366, 0.0
      %v371 = vmin.f32 %v367, 6.0
      %v372 = vmin.f32 %v368, 6.0
      %v373 = vmin.f32 %v369, 6.0
      %v374 = vmin.f32 %v370, 6.0
      %v375 = vmul.f32 %v349, %v371
      %v376 = vmul.f32 %v352, %v372
      %v377 = vmul.f32 %v357, %v373
      %v378 = vmul.f32 %v360, %v374
      %v379 = vmul.f32 %v375, 0.16666667
      %v380 = vmul.f32 %v376, 0.16666667
      %v381 = vmul.f32 %v377, 0.16666667
      %v382 = vmul.f32 %v378, 0.16666667
      %v383 = vpack.c.bf16 %v380, %v379
      %v384 = vpack.c.bf16 %v382, %v381
      %v385 = vld [vmem:[%s3] sm:$0xff]
      %v386 = vld [vmem:[%s3 + $0x8] sm:$0xff]
      %v387 = vld [vmem:[%s3 + $0x10] sm:$0xff]
      %v388 = vld [vmem:[%s3 + $0x18] sm:$0xff]
      %v389 = vld [vmem:[%s3 + $0x20] sm:$0xff]
      %v390 = vld [vmem:[%s3 + $0x28] sm:$0xff]
      %v391 = vld [vmem:[%s3 + $0x30] sm:$0xff]
      %v392 = vld [vmem:[%s3 + $0x38] sm:$0xff]
      %v401 = vunpack.c.l.b16 %v385
      %v402 = vunpack.c.h.b16 %v385
      %v403 = vunpack.c.l.b16 %v386
      %v404 = vunpack.c.h.b16 %v386
      %v405 = vunpack.c.l.b16 %v387
      %v406 = vunpack.c.h.b16 %v387
      %v407 = vunpack.c.l.b16 %v388
      %v408 = vunpack.c.h.b16 %v388
      %v409 = vunpack.c.l.b16 %v389
      %v410 = vunpack.c.h.b16 %v389
      %v411 = vunpack.c.l.b16 %v390
      %v412 = vunpack.c.h.b16 %v390
      %v413 = vunpack.c.l.b16 %v391
      %v414 = vunpack.c.h.b16 %v391
      %v415 = vunpack.c.l.b16 %v392
      %v416 = vunpack.c.h.b16 %v392
      %v417 = vpack.c.b16 %v409, %v401
      %v418 = vpack.c.b16 %v410, %v402
      %v419 = vpack.c.b16 %v411, %v403
      %v420 = vpack.c.b16 %v412, %v404
      %v421 = vpack.c.b16 %v413, %v405
      %v422 = vpack.c.b16 %v414, %v406
      %v423 = vpack.c.b16 %v415, %v407
      %v424 = vpack.c.b16 %v416, %v408
      %vm433 = vcmask 130048
      %v435 = vsel %vm433, %v383, 0
      %v438 = vsel %vm433, %v384, 0
      %440 = vmatprep.subr.bf16.mxu0 0
      %441 = vmatpush1.bf16.msra.mxu0 0
      %442 = vmatprep.subr.bf16.mxu0 0
      %443 = vmatpush1.bf16.msra.mxu0 0
      %444 = vmatprep.subr.bf16.mxu0 0
      %445 = vmatpush1.bf16.msra.mxu0 0
      %446 = vmatprep.subr.bf16.mxu0 0
      %447 = vmatpush1.bf16.msra.mxu0 0
      %448 = vmatprep.subr.bf16.mxu0 0
      %449 = vmatpush1.bf16.msra.mxu0 0
      %450 = vmatprep.subr.bf16.mxu0 0
      %451 = vmatpush1.bf16.msra.mxu0 0
      %452 = vmatprep.subr.bf16.mxu0 0
      %453 = vmatpush1.bf16.msra.mxu0 0
      %454 = vmatprep.subr.bf16.mxu0 %v418
      %455 = vmatpush1.bf16.msra.mxu0 %v417
      %456 = vmatprep.subr.bf16.mxu0 0
      %457 = vmatpush2.bf16.msra.mxu0 0
      %458 = vmatprep.subr.bf16.mxu0 0
      %459 = vmatpush2.bf16.msra.mxu0 0
      %460 = vmatprep.subr.bf16.mxu0 0
      %461 = vmatpush2.bf16.msra.mxu0 0
      %462 = vmatprep.subr.bf16.mxu0 0
      %463 = vmatpush2.bf16.msra.mxu0 0
      %464 = vmatprep.subr.bf16.mxu0 0
      %465 = vmatpush2.bf16.msra.mxu0 0
      %466 = vmatprep.subr.bf16.mxu0 0
      %467 = vmatpush2.bf16.msra.mxu0 0
      %468 = vmatprep.subr.bf16.mxu0 0
      %469 = vmatpush2.bf16.msra.mxu0 0
      %470 = vmatprep.subr.bf16.mxu0 0
      %471 = vmatpush2.bf16.msra.mxu0 0
      %472 = vmatprep.mubr.bf16.mxu0 0
      %473 = vmatmul.mubr.bf16.gmra.mxu0 %v435
      %v474 = vpop.f32.mrf.mxu0
      %v475 = vadd.f32 0.0, %v474
      %v476 = vpop.f32.mrf.mxu0
      %v477 = vadd.f32 0.0, %v476
      %v478 = vpop.f32.mrf.mxu0
      %v479 = vadd.f32 0.0, %v478
      %v480 = vpop.f32.mrf.mxu0
      %v481 = vadd.f32 0.0, %v480
      %482 = vmatprep.mubr.bf16.mxu0 0
      %483 = vmatmul.mubr.bf16.gmra.mxu0 %v438
      %v484 = vpop.f32.mrf.mxu0
      %v485 = vadd.f32 0.0, %v484
      %v486 = vpop.f32.mrf.mxu0
      %v487 = vadd.f32 0.0, %v486
      %v488 = vpop.f32.mrf.mxu0
      %v489 = vadd.f32 0.0, %v488
      %v490 = vpop.f32.mrf.mxu0
      %v491 = vadd.f32 0.0, %v490
      %492 = vdwg.mxu0
      %493 = vmatprep.subr.bf16.mxu0 0
      %494 = vmatpush1.bf16.msra.mxu0 0
      %495 = vmatprep.subr.bf16.mxu0 0
      %496 = vmatpush1.bf16.msra.mxu0 0
      %497 = vmatprep.subr.bf16.mxu0 0
      %498 = vmatpush1.bf16.msra.mxu0 0
      %499 = vmatprep.subr.bf16.mxu0 0
      %500 = vmatpush1.bf16.msra.mxu0 0
      %501 = vmatprep.subr.bf16.mxu0 0
      %502 = vmatpush1.bf16.msra.mxu0 0
      %503 = vmatprep.subr.bf16.mxu0 0
      %504 = vmatpush1.bf16.msra.mxu0 0
      %505 = vmatprep.subr.bf16.mxu0 0
      %506 = vmatpush1.bf16.msra.mxu0 0
      %507 = vmatprep.subr.bf16.mxu0 %v420
      %508 = vmatpush1.bf16.msra.mxu0 %v419
      %509 = vmatprep.subr.bf16.mxu0 0
      %510 = vmatpush2.bf16.msra.mxu0 0
      %511 = vmatprep.subr.bf16.mxu0 0
      %512 = vmatpush2.bf16.msra.mxu0 0
      %513 = vmatprep.subr.bf16.mxu0 0
      %514 = vmatpush2.bf16.msra.mxu0 0
      %515 = vmatprep.subr.bf16.mxu0 0
      %516 = vmatpush2.bf16.msra.mxu0 0
      %517 = vmatprep.subr.bf16.mxu0 0
      %518 = vmatpush2.bf16.msra.mxu0 0
      %519 = vmatprep.subr.bf16.mxu0 0
      %520 = vmatpush2.bf16.msra.mxu0 0
      %521 = vmatprep.subr.bf16.mxu0 0
      %522 = vmatpush2.bf16.msra.mxu0 0
      %523 = vmatprep.subr.bf16.mxu0 0
      %524 = vmatpush2.bf16.msra.mxu0 0
      %525 = vmatprep.mubr.bf16.mxu0 0
      %526 = vmatmul.mubr.bf16.gmra.mxu0 %v435
      %v527 = vpop.f32.mrf.mxu0
      %v528 = vadd.f32 0.0, %v527
      %v529 = vpop.f32.mrf.mxu0
      %v530 = vadd.f32 0.0, %v529
      %v531 = vpop.f32.mrf.mxu0
      %v532 = vadd.f32 0.0, %v531
      %v533 = vpop.f32.mrf.mxu0
      %v534 = vadd.f32 0.0, %v533
      %535 = vmatprep.mubr.bf16.mxu0 0
      %536 = vmatmul.mubr.bf16.gmra.mxu0 %v438
      %v537 = vpop.f32.mrf.mxu0
      %v538 = vadd.f32 0.0, %v537
      %v539 = vpop.f32.mrf.mxu0
      %v540 = vadd.f32 0.0, %v539
      %v541 = vpop.f32.mrf.mxu0
      %v542 = vadd.f32 0.0, %v541
      %v543 = vpop.f32.mrf.mxu0
      %v544 = vadd.f32 0.0, %v543
      %545 = vdwg.mxu0
      %546 = vmatprep.subr.bf16.mxu0 0
      %547 = vmatpush1.bf16.msra.mxu0 0
      %548 = vmatprep.subr.bf16.mxu0 0
      %549 = vmatpush1.bf16.msra.mxu0 0
      %550 = vmatprep.subr.bf16.mxu0 0
      %551 = vmatpush1.bf16.msra.mxu0 0
      %552 = vmatprep.subr.bf16.mxu0 0
      %553 = vmatpush1.bf16.msra.mxu0 0
      %554 = vmatprep.subr.bf16.mxu0 0
      %555 = vmatpush1.bf16.msra.mxu0 0
      %556 = vmatprep.subr.bf16.mxu0 0
      %557 = vmatpush1.bf16.msra.mxu0 0
      %558 = vmatprep.subr.bf16.mxu0 0
      %559 = vmatpush1.bf16.msra.mxu0 0
      %560 = vmatprep.subr.bf16.mxu0 %v422
      %561 = vmatpush1.bf16.msra.mxu0 %v421
      %562 = vmatprep.subr.bf16.mxu0 0
      %563 = vmatpush2.bf16.msra.mxu0 0
      %564 = vmatprep.subr.bf16.mxu0 0
      %565 = vmatpush2.bf16.msra.mxu0 0
      %566 = vmatprep.subr.bf16.mxu0 0
      %567 = vmatpush2.bf16.msra.mxu0 0
      %568 = vmatprep.subr.bf16.mxu0 0
      %569 = vmatpush2.bf16.msra.mxu0 0
      %570 = vmatprep.subr.bf16.mxu0 0
      %571 = vmatpush2.bf16.msra.mxu0 0
      %572 = vmatprep.subr.bf16.mxu0 0
      %573 = vmatpush2.bf16.msra.mxu0 0
      %574 = vmatprep.subr.bf16.mxu0 0
      %575 = vmatpush2.bf16.msra.mxu0 0
      %576 = vmatprep.subr.bf16.mxu0 0
      %577 = vmatpush2.bf16.msra.mxu0 0
      %578 = vmatprep.mubr.bf16.mxu0 0
      %579 = vmatmul.mubr.bf16.gmra.mxu0 %v435
      %v580 = vpop.f32.mrf.mxu0
      %v581 = vadd.f32 0.0, %v580
      %v582 = vpop.f32.mrf.mxu0
      %v583 = vadd.f32 0.0, %v582
      %v584 = vpop.f32.mrf.mxu0
      %v585 = vadd.f32 0.0, %v584
      %v586 = vpop.f32.mrf.mxu0
      %v587 = vadd.f32 0.0, %v586
      %588 = vmatprep.mubr.bf16.mxu0 0
      %589 = vmatmul.mubr.bf16.gmra.mxu0 %v438
      %v590 = vpop.f32.mrf.mxu0
      %v591 = vadd.f32 0.0, %v590
      %v592 = vpop.f32.mrf.mxu0
      %v593 = vadd.f32 0.0, %v592
      %v594 = vpop.f32.mrf.mxu0
      %v595 = vadd.f32 0.0, %v594
      %v596 = vpop.f32.mrf.mxu0
      %v597 = vadd.f32 0.0, %v596
      %598 = vdwg.mxu0
      %599 = vmatprep.subr.bf16.mxu0 0
      %600 = vmatpush1.bf16.msra.mxu0 0
      %601 = vmatprep.subr.bf16.mxu0 0
      %602 = vmatpush1.bf16.msra.mxu0 0
      %603 = vmatprep.subr.bf16.mxu0 0
      %604 = vmatpush1.bf16.msra.mxu0 0
      %605 = vmatprep.subr.bf16.mxu0 0
      %606 = vmatpush1.bf16.msra.mxu0 0
      %607 = vmatprep.subr.bf16.mxu0 0
      %608 = vmatpush1.bf16.msra.mxu0 0
      %609 = vmatprep.subr.bf16.mxu0 0
      %610 = vmatpush1.bf16.msra.mxu0 0
      %611 = vmatprep.subr.bf16.mxu0 0
      %612 = vmatpush1.bf16.msra.mxu0 0
      %613 = vmatprep.subr.bf16.mxu0 %v424
      %614 = vmatpush1.bf16.msra.mxu0 %v423
      %615 = vmatprep.subr.bf16.mxu0 0
      %616 = vmatpush2.bf16.msra.mxu0 0
      %617 = vmatprep.subr.bf16.mxu0 0
      %618 = vmatpush2.bf16.msra.mxu0 0
      %619 = vmatprep.subr.bf16.mxu0 0
      %620 = vmatpush2.bf16.msra.mxu0 0
      %621 = vmatprep.subr.bf16.mxu0 0
      %622 = vmatpush2.bf16.msra.mxu0 0
      %623 = vmatprep.subr.bf16.mxu0 0
      %624 = vmatpush2.bf16.msra.mxu0 0
      %625 = vmatprep.subr.bf16.mxu0 0
      %626 = vmatpush2.bf16.msra.mxu0 0
      %627 = vmatprep.subr.bf16.mxu0 0
      %628 = vmatpush2.bf16.msra.mxu0 0
      %629 = vmatprep.subr.bf16.mxu0 0
      %630 = vmatpush2.bf16.msra.mxu0 0
      %631 = vmatprep.mubr.bf16.mxu0 0
      %632 = vmatmul.mubr.bf16.gmra.mxu0 %v435
      %v633 = vpop.f32.mrf.mxu0
      %v634 = vadd.f32 0.0, %v633
      %v635 = vpop.f32.mrf.mxu0
      %v636 = vadd.f32 0.0, %v635
      %v637 = vpop.f32.mrf.mxu0
      %v638 = vadd.f32 0.0, %v637
      %v639 = vpop.f32.mrf.mxu0
      %v640 = vadd.f32 0.0, %v639
      %641 = vmatprep.mubr.bf16.mxu0 0
      %642 = vmatmul.mubr.bf16.gmra.mxu0 %v438
      %v643 = vpop.f32.mrf.mxu0
      %v644 = vadd.f32 0.0, %v643
      %v645 = vpop.f32.mrf.mxu0
      %v646 = vadd.f32 0.0, %v645
      %v647 = vpop.f32.mrf.mxu0
      %v648 = vadd.f32 0.0, %v647
      %v649 = vpop.f32.mrf.mxu0
      %v650 = vadd.f32 0.0, %v649
      %651 = vdwg.mxu0
      %v652 = vmax.f32 %v475, 0.0
      %v653 = vmax.f32 %v477, 0.0
      %v654 = vmax.f32 %v528, 0.0
      %v655 = vmax.f32 %v530, 0.0
      %v656 = vmax.f32 %v581, 0.0
      %v657 = vmax.f32 %v583, 0.0
      %v658 = vmax.f32 %v634, 0.0
      %v659 = vmax.f32 %v636, 0.0
      %v660 = vmax.f32 %v479, 0.0
      %v661 = vmax.f32 %v481, 0.0
      %v662 = vmax.f32 %v532, 0.0
      %v663 = vmax.f32 %v534, 0.0
      %v664 = vmax.f32 %v585, 0.0
      %v665 = vmax.f32 %v587, 0.0
      %v666 = vmax.f32 %v638, 0.0
      %v667 = vmax.f32 %v640, 0.0
      %v668 = vmax.f32 %v485, 0.0
      %v669 = vmax.f32 %v487, 0.0
      %v670 = vmax.f32 %v538, 0.0
      %v671 = vmax.f32 %v540, 0.0
      %v672 = vmax.f32 %v591, 0.0
      %v673 = vmax.f32 %v593, 0.0
      %v674 = vmax.f32 %v644, 0.0
      %v675 = vmax.f32 %v646, 0.0
      %v676 = vmax.f32 %v489, 0.0
      %v677 = vmax.f32 %v491, 0.0
      %v678 = vmax.f32 %v542, 0.0
      %v679 = vmax.f32 %v544, 0.0
      %v680 = vmax.f32 %v595, 0.0
      %v681 = vmax.f32 %v597, 0.0
      %v682 = vmax.f32 %v648, 0.0
      %v683 = vmax.f32 %v650, 0.0
      %s684 = sadd.s32 %s21, %s22
      %s685 = smul.u32 %s684, 32
      %s686 = ssub.s32 64, %s685
      %v687 = vlaneseq
      %v688 = vshrl.u32 %v687, 7
      %v689 = vadd.s32 %v688, 8
      %v690 = vadd.s32 %v688, 16
      %v691 = vadd.s32 %v688, 24
      %v692 = vstv %s686
      %vm693 = vcmp.lt.s32.totalorder %v688, %v692
      %vm694 = vcmp.lt.s32.totalorder %v689, %v692
      %vm695 = vcmp.lt.s32.totalorder %v690, %v692
      %vm696 = vcmp.lt.s32.totalorder %v691, %v692
      %v697 = vsel %vm693, 1, 0
      %v698 = vsel %vm694, 1, 0
      %v699 = vsel %vm695, 1, 0
      %v700 = vsel %vm696, 1, 0
      %vm701 = vcmp.eq.s32.totalorder %v697, 1
      %vm702 = vcmp.eq.s32.totalorder %v698, 1
      %vm703 = vcmp.eq.s32.totalorder %v699, 1
      %vm704 = vcmp.eq.s32.totalorder %v700, 1
      %v705 = vsel %vm701, %v652, 0.0
      %v706 = vsel %vm701, %v653, 0.0
      %v707 = vsel %vm701, %v654, 0.0
      %v708 = vsel %vm701, %v655, 0.0
      %v709 = vsel %vm701, %v656, 0.0
      %v710 = vsel %vm701, %v657, 0.0
      %v711 = vsel %vm701, %v658, 0.0
      %v712 = vsel %vm701, %v659, 0.0
      %v713 = vsel %vm702, %v660, 0.0
      %v714 = vsel %vm702, %v661, 0.0
      %v715 = vsel %vm702, %v662, 0.0
      %v716 = vsel %vm702, %v663, 0.0
      %v717 = vsel %vm702, %v664, 0.0
      %v718 = vsel %vm702, %v665, 0.0
      %v719 = vsel %vm702, %v666, 0.0
      %v720 = vsel %vm702, %v667, 0.0
      %v721 = vsel %vm703, %v668, 0.0
      %v722 = vsel %vm703, %v669, 0.0
      %v723 = vsel %vm703, %v670, 0.0
      %v724 = vsel %vm703, %v671, 0.0
      %v725 = vsel %vm703, %v672, 0.0
      %v726 = vsel %vm703, %v673, 0.0
      %v727 = vsel %vm703, %v674, 0.0
      %v728 = vsel %vm703, %v675, 0.0
      %v729 = vsel %vm704, %v676, 0.0
      %v730 = vsel %vm704, %v677, 0.0
      %v731 = vsel %vm704, %v678, 0.0
      %v732 = vsel %vm704, %v679, 0.0
      %v733 = vsel %vm704, %v680, 0.0
      %v734 = vsel %vm704, %v681, 0.0
      %v735 = vsel %vm704, %v682, 0.0
      %v736 = vsel %vm704, %v683, 0.0
      %v737 = vld [vmem:[#allocation2] sm:$0xff]
      %v738 = vld [vmem:[#allocation2 + $0x8] sm:$0xff]
      %v739 = vld [vmem:[#allocation2 + $0x10] sm:$0xff]
      %v740 = vld [vmem:[#allocation2 + $0x18] sm:$0xff]
      %v741 = vld [vmem:[#allocation2 + $0x20] sm:$0xff]
      %v742 = vld [vmem:[#allocation2 + $0x28] sm:$0xff]
      %v743 = vld [vmem:[#allocation2 + $0x30] sm:$0xff]
      %v744 = vld [vmem:[#allocation2 + $0x38] sm:$0xff]
      %v745 = vadd.f32 %v705, %v713
      %v746 = vadd.f32 %v745, %v721
      %v747 = vadd.f32 %v746, %v729
      %v748 = vadd.f32 %v706, %v714
      %v749 = vadd.f32 %v748, %v722
      %v750 = vadd.f32 %v749, %v730
      %v751 = vadd.f32 %v707, %v715
      %v752 = vadd.f32 %v751, %v723
      %v753 = vadd.f32 %v752, %v731
      %v754 = vadd.f32 %v708, %v716
      %v755 = vadd.f32 %v754, %v724
      %v756 = vadd.f32 %v755, %v732
      %v757 = vadd.f32 %v709, %v717
      %v758 = vadd.f32 %v757, %v725
      %v759 = vadd.f32 %v758, %v733
      %v760 = vadd.f32 %v710, %v718
      %v761 = vadd.f32 %v760, %v726
      %v762 = vadd.f32 %v761, %v734
      %v763 = vadd.f32 %v711, %v719
      %v764 = vadd.f32 %v763, %v727
      %v765 = vadd.f32 %v764, %v735
      %vm766 = vcmask 523264
      %v767 = vsel %vm766, %v712, 0.0
      %v768 = vsel %vm766, %v720, 0.0
      %v769 = vadd.f32 %v767, %v768
      %v770 = vsel %vm766, %v728, 0.0
      %v771 = vadd.f32 %v769, %v770
      %v772 = vsel %vm766, %v736, 0.0
      %v773 = vadd.f32 %v771, %v772
      %v774 = vadd.f32 %v737, %v747
      %v775 = vadd.f32 %v738, %v750
      %v776 = vadd.f32 %v739, %v753
      %v777 = vadd.f32 %v740, %v756
      %v778 = vadd.f32 %v741, %v759
      %v779 = vadd.f32 %v742, %v762
      %v780 = vadd.f32 %v743, %v765
      %v781 = vadd.f32 %v744, %v773
      %782 = vst [vmem:[#allocation2] sm:$0xff] %v774
      %783 = vst [vmem:[#allocation2 + $0x8] sm:$0xff] %v775
      %784 = vst [vmem:[#allocation2 + $0x10] sm:$0xff] %v776
      %785 = vst [vmem:[#allocation2 + $0x18] sm:$0xff] %v777
      %786 = vst [vmem:[#allocation2 + $0x20] sm:$0xff] %v778
      %787 = vst [vmem:[#allocation2 + $0x28] sm:$0xff] %v779
      %788 = vst [vmem:[#allocation2 + $0x30] sm:$0xff] %v780
      %789 = vst.msk [vmem:[#allocation2 + $0x38] sm:$0xff] %vm766, %v781
      // Predicated region
      $region41: #{_forward_impl.2} parent=35 // pred_check
        %p790 = pneg %p251
      $region42: #{_forward_impl.2} parent=35 // pred_check_branch
        %792 = sbr.rel (%p790) target = $region44
      $region43: #{_forward_impl.2} parent=35 // pred_region
        %v793 = vld [vmem:[#allocation2] sm:$0xff]
        %v794 = vld [vmem:[#allocation2 + $0x8] sm:$0xff]
        %v795 = vld [vmem:[#allocation2 + $0x10] sm:$0xff]
        %v796 = vld [vmem:[#allocation2 + $0x18] sm:$0xff]
        %v797 = vld [vmem:[#allocation2 + $0x20] sm:$0xff]
        %v798 = vld [vmem:[#allocation2 + $0x28] sm:$0xff]
        %v799 = vld [vmem:[#allocation2 + $0x30] sm:$0xff]
        %v800 = vld [vmem:[#allocation2 + $0x38] sm:$0xff]
        %801 = vst [vmem:[%s249] sm:$0xff] %v793
        %802 = vst [vmem:[%s249 + $0x8] sm:$0xff] %v794
        %803 = vst [vmem:[%s249 + $0x10] sm:$0xff] %v795
        %804 = vst [vmem:[%s249 + $0x18] sm:$0xff] %v796
        %805 = vst [vmem:[%s249 + $0x20] sm:$0xff] %v797
        %806 = vst [vmem:[%s249 + $0x28] sm:$0xff] %v798
        %807 = vst [vmem:[%s249 + $0x30] sm:$0xff] %v799
        %808 = vst.msk [vmem:[%s249 + $0x38] sm:$0xff] %vm766, %v800
      $region44: #{_forward_impl.2} parent=35 // pred_fallthru
        _
      %p809 = scmp.lt.s32.totalorder %s20, 1
      %s810 = scalar_select %p809, %s20, 1
      %p811 = scmp.lt.s32.totalorder %s21, 1
      %s812 = scalar_select %p811, %s21, 1
      %s813 = smul.addr %s812, 8
      %s814 = smul.addr %s810, 16
      %s815 = sadd.s32 %s813, %s814
      %s816 = smul.addr %s815, 8
      %s817 = scalar_lea.vmem %s4, %s816
      // Predicated region
      $region45: #{_forward_impl.2} parent=35 // pred_check
        %p818 = pneg %p147
      $region46: #{_forward_impl.2} parent=35 // pred_check_branch
        %820 = sbr.rel (%p818) target = $region48
      $region47: #{_forward_impl.2} parent=35 // pred_region
        _
      $region48: #{_forward_impl.2} parent=35 // pred_fallthru
        _
    $region36: #{_forward_impl.2} parent=5 // pred_fallthru
      _
    %p821 = scmp.le.s32.totalorder 2, %s10
    // Predicated region
    $region49: #{_forward_impl.2} parent=5 // pred_check
      %p822 = pneg %p821
    $region50: #{_forward_impl.2} parent=5 // pred_check_branch
      %824 = sbr.rel (%p822) target = $region52
    $region51: #{_forward_impl.2} parent=5 // pred_region
      %s825 = ssub.s32 %s10, 2
      // Predicated region
      $region53: #{_forward_impl.2} parent=51 // pred_check
        %p826 = pneg %p153
      $region54: #{_forward_impl.2} parent=51 // pred_check_branch
        %828 = sbr.rel (%p826) target = $region56
      $region55: #{_forward_impl.2} parent=51 // pred_region
        %p829 = scmp.lt.s32.totalorder %s23, 1
        %s830 = scalar_select %p829, %s23, 1
        %p831 = scmp.lt.s32.totalorder %s24, 1
        %s832 = scalar_select %p831, %s24, 1
        %s833 = smul.addr %s832, 8
        %s834 = smul.addr %s830, 16
        %s835 = sadd.s32 %s833, %s834
        %s836 = smul.addr %s835, 8
        %s837 = scalar_lea.vmem %s4, %s836
      $region56: #{_forward_impl.2} parent=51 // pred_fallthru
        _
    $region52: #{_forward_impl.2} parent=5 // pred_fallthru
      _
  $region6: #{_forward_impl.2} parent=0 // loop_footer
    %s14 = sadd.s32 1, %s10
  $region7: #{_forward_impl.2} parent=0 // loop_footer_branch
    %9 = sbr.rel target = $region3
  $region8: #{_forward_impl.2} parent=0 // loop_exit
    _

// kernel: _forward_impl.3
$region0: #{_forward_impl.3}
  #allocation0 [shape = 'u32[]', space=smem, size = 0x4, offset = 0x4, fixed_abs, tag = 'smem constant byte address 0x4 - core index']
  #allocation1 [shape = 'u32[144,128]{1,0:T(1,128)}', space=vmem, size = 0x12000, scoped, tag = 'internal scratch']
  %s0 = inlined_call_operand.vmem [shape: f32[2,2,8,960], index: 0, kind: input, shape index: {}]
  %s1 = inlined_call_operand.vmem [shape: f32[960,128], index: 1, kind: input, shape index: {}]
  %s2 = inlined_call_operand.vmem [shape: f32[1,128], index: 2, kind: input, shape index: {}]
  %s3 = inlined_call_operand.vmem [shape: f32[2,8,128], index: 3, kind: output, shape index: {}]
  %s4 = sld [smem:[#allocation0]]
  $region45: #{_forward_impl.3} parent=0
    _
  %s6 = ssub.s32 1, %s4
  %s7 = scalar_select 0, %s6, %s4
  loop: start=0, step=1, limit=4
  $region2: #{_forward_impl.3} parent=0 // loop_pre_header
    _
  $region3: #{_forward_impl.3} parent=0 // loop_header
    %s9 = sphi 0, %s13
    %p10 = scmp.ge.s32.totalorder %s9, 4
    %s19 = sphi 0, %s21
    %s22 = sphi 0, %s19
    %s23 = sphi 0, %s22
    %s39 = sphi 0, %s23
    %s43 = sphi 0, %s43
    %s45 = sphi 0, %s43
    %s46 = sphi 0, %s45
    %s60 = sphi 0, %s46
    %s64 = sphi 0, %s64
    %s66 = sphi 0, %s64
    %s67 = sphi 0, %s66
    %s81 = sphi 0, %s67
    %s87 = sphi 0, %s89
    %s90 = sphi 0, %s87
    %s91 = sphi 0, %s90
    %s107 = sphi 0, %s91
  $region4: #{_forward_impl.3} parent=0 // loop_header_branch
    %12 = sbr.rel (%p10) target = $region8
  $region5: #{_forward_impl.3} parent=0 // loop_body
    %s14 = ssub.s32 %s9, 1
    %s15 = ssub.s32 %s9, 2
    %s16 = sadd.s32 %s9, 1
    %s17 = ssub.s32 %s9, %s16
    %p18 = scmp.eq.s32.totalorder %s17, 0
    %s20 = sadd.s32 %s19, 1
    %s21 = scalar_select %p18, %s19, %s20
    %p24 = pneg %p18
    %p25 = scmp.eq.s32.totalorder %s9, 1
    %p26 = por %p24, %p25
    %p27 = scmp.ne.s32.totalorder %s19, %s22
    %p28 = scmp.eq.s32.totalorder %s9, 0
    %p29 = por %p27, %p28
    %p30 = scmp.ne.s32.totalorder %s19, %s22
    %p31 = scmp.eq.s32.totalorder %s14, 1
    %p32 = por %p30, %p31
    %p33 = scmp.ne.s32.totalorder %s22, %s23
    %p34 = scmp.eq.s32.totalorder %s14, 0
    %p35 = por %p33, %p34
    %p36 = scmp.ne.s32.totalorder %s22, %s23
    %p37 = scmp.eq.s32.totalorder %s15, 1
    %p38 = por %p36, %p37
    %p40 = scmp.ne.s32.totalorder %s23, %s39
    %p41 = scmp.eq.s32.totalorder %s15, 0
    %p42 = por %p40, %p41
    %s44 = sadd.s32 %s43, 1
    %p47 = scmp.eq.s32.totalorder %s9, 1
    %p48 = scmp.ne.s32.totalorder %s43, %s45
    %p49 = scmp.eq.s32.totalorder %s9, 0
    %p50 = por %p48, %p49
    %p51 = scmp.ne.s32.totalorder %s43, %s45
    %p52 = scmp.eq.s32.totalorder %s14, 1
    %p53 = por %p51, %p52
    %p54 = scmp.ne.s32.totalorder %s45, %s46
    %p55 = scmp.eq.s32.totalorder %s14, 0
    %p56 = por %p54, %p55
    %p57 = scmp.ne.s32.totalorder %s45, %s46
    %p58 = scmp.eq.s32.totalorder %s15, 1
    %p59 = por %p57, %p58
    %p61 = scmp.ne.s32.totalorder %s46, %s60
    %p62 = scmp.eq.s32.totalorder %s15, 0
    %p63 = por %p61, %p62
    %s65 = sadd.s32 %s64, 1
    %p68 = scmp.eq.s32.totalorder %s9, 1
    %p69 = scmp.ne.s32.totalorder %s64, %s66
    %p70 = scmp.eq.s32.totalorder %s9, 0
    %p71 = por %p69, %p70
    %p72 = scmp.ne.s32.totalorder %s64, %s66
    %p73 = scmp.eq.s32.totalorder %s14, 1
    %p74 = por %p72, %p73
    %p75 = scmp.ne.s32.totalorder %s66, %s67
    %p76 = scmp.eq.s32.totalorder %s14, 0
    %p77 = por %p75, %p76
    %p78 = scmp.ne.s32.totalorder %s66, %s67
    %p79 = scmp.eq.s32.totalorder %s15, 1
    %p80 = por %p78, %p79
    %p82 = scmp.ne.s32.totalorder %s67, %s81
    %p83 = scmp.eq.s32.totalorder %s15, 0
    %p84 = por %p82, %p83
    %s85 = ssub.s32 %s9, %s16
    %p86 = scmp.eq.s32.totalorder %s85, 0
    %s88 = sadd.s32 %s87, 1
    %s89 = scalar_select %p86, %s87, %s88
    %p92 = pneg %p86
    %p93 = scmp.eq.s32.totalorder %s9, 1
    %p94 = por %p92, %p93
    %p95 = scmp.ne.s32.totalorder %s87, %s90
    %p96 = scmp.eq.s32.totalorder %s9, 0
    %p97 = por %p95, %p96
    %p98 = scmp.ne.s32.totalorder %s87, %s90
    %p99 = scmp.eq.s32.totalorder %s14, 1
    %p100 = por %p98, %p99
    %p101 = scmp.ne.s32.totalorder %s90, %s91
    %p102 = scmp.eq.s32.totalorder %s14, 0
    %p103 = por %p101, %p102
    %p104 = scmp.ne.s32.totalorder %s90, %s91
    %p105 = scmp.eq.s32.totalorder %s15, 1
    %p106 = por %p104, %p105
    %p108 = scmp.ne.s32.totalorder %s91, %s107
    %p109 = scmp.eq.s32.totalorder %s15, 0
    %p110 = por %p108, %p109
    %p111 = scmp.le.s32.totalorder 1, %s9
    %p112 = scmp.lt.s32.totalorder %s9, 3
    %p113 = pnand %p111, %p112
    %p114 = pneg %p113
    // Predicated region
    $region9: #{_forward_impl.3} parent=5 // pred_check
      _
    $region10: #{_forward_impl.3} parent=5 // pred_check_branch
      %116 = sbr.rel (%p113) target = $region12
    $region11: #{_forward_impl.3} parent=5 // pred_region
      %s117 = ssub.s32 %s9, 1
      // Predicated region
      $region13: #{_forward_impl.3} parent=11 // pred_check
        %p118 = pneg %p56
      $region14: #{_forward_impl.3} parent=11 // pred_check_branch
        %120 = sbr.rel (%p118) target = $region16
      $region15: #{_forward_impl.3} parent=11 // pred_region
        _
      $region16: #{_forward_impl.3} parent=11 // pred_fallthru
        _
      // Predicated region
      $region17: #{_forward_impl.3} parent=11 // pred_check
        %p121 = pneg %p77
      $region18: #{_forward_impl.3} parent=11 // pred_check_branch
        %123 = sbr.rel (%p121) target = $region20
      $region19: #{_forward_impl.3} parent=11 // pred_region
        _
      $region20: #{_forward_impl.3} parent=11 // pred_fallthru
        _
    $region12: #{_forward_impl.3} parent=5 // pred_fallthru
      _
    %p124 = scmp.lt.s32.totalorder %s9, 2
    // Predicated region
    $region21: #{_forward_impl.3} parent=5 // pred_check
      %p125 = pneg %p124
    $region22: #{_forward_impl.3} parent=5 // pred_check_branch
      %127 = sbr.rel (%p125) target = $region24
    $region23: #{_forward_impl.3} parent=5 // pred_region
      // Predicated region
      $region25: #{_forward_impl.3} parent=23 // pred_check
        %p128 = pneg %p29
      $region26: #{_forward_impl.3} parent=23 // pred_check_branch
        %130 = sbr.rel (%p128) target = $region28
      $region27: #{_forward_impl.3} parent=23 // pred_region
        %p131 = scmp.lt.s32.totalorder %s9, 1
        %s132 = scalar_select %p131, %s9, 1
        %s133 = smul.addr %s132, 16
        %s134 = smul.addr %s133, 8
        %s135 = scalar_lea.vmem %s0, %s134
      $region28: #{_forward_impl.3} parent=23 // pred_fallthru
        _
    $region24: #{_forward_impl.3} parent=5 // pred_fallthru
      _
    %p136 = scmp.le.s32.totalorder 1, %s9
    %p137 = scmp.lt.s32.totalorder %s9, 3
    %p138 = pnand %p136, %p137
    %p139 = pneg %p138
    // Predicated region
    $region29: #{_forward_impl.3} parent=5 // pred_check
      _
    $region30: #{_forward_impl.3} parent=5 // pred_check_branch
      %141 = sbr.rel (%p138) target = $region32
    $region31: #{_forward_impl.3} parent=5 // pred_region
      %s142 = ssub.s32 %s9, 1
      %p143 = scmp.lt.s32.totalorder %s14, 1
      %s144 = scalar_select %p143, %s14, 1
      %s145 = smul.addr %s144, 16
      %s146 = smul.addr %s145, 8
      %s147 = scalar_lea.vmem %s0, %s146
      %p148 = pneg %p35
      %p149 = pneg %p32
      %p150 = pneg %p56
      %p151 = pneg %p53
      %p152 = pneg %p77
      %p153 = pneg %p74
      %p154 = pneg %p103
      %p155 = pneg %p100
      %p156 = scmp.lt.s32.totalorder %s14, 1
      %s157 = scalar_select %p156, %s14, 1
      %s158 = smul.addr %s157, 8
      %s159 = scalar_lea.vmem %s3, %s158
      %p160 = scmp.lt.s32.totalorder %s14, 1
      %s161 = scalar_select %p160, %s14, 1
      %s162 = smul.addr %s161, 16
      %s163 = smul.addr %s162, 8
      %s164 = scalar_lea.vmem %s0, %s163
      %p165 = scmp.lt.s32.totalorder %s14, 1
      %s166 = scalar_select %p165, %s14, 1
      %s167 = smul.addr %s166, 8
      %s168 = scalar_lea.vmem %s3, %s167
      %v169 = vld [vmem:[%s164] sm:$0xff]
      %v170 = vld [vmem:[%s164 + $0x8] sm:$0xff]
      %v171 = vld [vmem:[%s164 + $0x10] sm:$0xff]
      %v172 = vld [vmem:[%s164 + $0x18] sm:$0xff]
      %v173 = vld [vmem:[%s164 + $0x20] sm:$0xff]
      %v174 = vld [vmem:[%s164 + $0x28] sm:$0xff]
      %v175 = vld [vmem:[%s164 + $0x30] sm:$0xff]
      %v176 = vld [vmem:[%s164 + $0x38] sm:$0xff]
      %v177 = vld [vmem:[%s164 + $0x40] sm:$0xff]
      %v178 = vld [vmem:[%s164 + $0x48] sm:$0xff]
      %v179 = vld [vmem:[%s164 + $0x50] sm:$0xff]
      %v180 = vld [vmem:[%s164 + $0x58] sm:$0xff]
      %v181 = vld [vmem:[%s164 + $0x60] sm:$0xff]
      %v182 = vld [vmem:[%s164 + $0x68] sm:$0xff]
      %v183 = vld [vmem:[%s164 + $0x70] sm:$0xff]
      %v184 = vld [vmem:[%s164 + $0x78] sm:$0xff]
      %v185 = vadd.f32 %v169, %v177
      %v186 = vadd.f32 %v170, %v178
      %v187 = vadd.f32 %v171, %v179
      %v188 = vadd.f32 %v172, %v180
      %v189 = vadd.f32 %v173, %v181
      %v190 = vadd.f32 %v174, %v182
      %v191 = vadd.f32 %v175, %v183
      %vm192 = vcmask 523264
      %v193 = vsel %vm192, %v176, 0.0
      %v194 = vsel %vm192, %v184, 0.0
      %v195 = vadd.f32 %v193, %v194
      %v196 = vrot.slane %v185, 4
      %v197 = vadd.f32 %v185, %v196
      %v198 = vrot.slane %v197, 2
      %v199 = vadd.f32 %v197, %v198
      %v200 = vrot.slane %v199, 1
      %v201 = vadd.f32 %v199, %v200
      %v202 = vrot.slane %v186, 4
      %v203 = vadd.f32 %v186, %v202
      %v204 = vrot.slane %v203, 2
      %v205 = vadd.f32 %v203, %v204
      %v206 = vrot.slane %v205, 1
      %v207 = vadd.f32 %v205, %v206
      %v208 = vrot.slane %v187, 4
      %v209 = vadd.f32 %v187, %v208
      %v210 = vrot.slane %v209, 2
      %v211 = vadd.f32 %v209, %v210
      %v212 = vrot.slane %v211, 1
      %v213 = vadd.f32 %v211, %v212
      %v214 = vrot.slane %v188, 4
      %v215 = vadd.f32 %v188, %v214
      %v216 = vrot.slane %v215, 2
      %v217 = vadd.f32 %v215, %v216
      %v218 = vrot.slane %v217, 1
      %v219 = vadd.f32 %v217, %v218
      %v220 = vrot.slane %v189, 4
      %v221 = vadd.f32 %v189, %v220
      %v222 = vrot.slane %v221, 2
      %v223 = vadd.f32 %v221, %v222
      %v224 = vrot.slane %v223, 1
      %v225 = vadd.f32 %v223, %v224
      %v226 = vrot.slane %v190, 4
      %v227 = vadd.f32 %v190, %v226
      %v228 = vrot.slane %v227, 2
      %v229 = vadd.f32 %v227, %v228
      %v230 = vrot.slane %v229, 1
      %v231 = vadd.f32 %v229, %v230
      %v232 = vrot.slane %v191, 4
      %v233 = vadd.f32 %v191, %v232
      %v234 = vrot.slane %v233, 2
      %v235 = vadd.f32 %v233, %v234
      %v236 = vrot.slane %v235, 1
      %v237 = vadd.f32 %v235, %v236
      %v238 = vsel %vm192, %v195, 0.0
      %v239 = vrot.slane %v238, 4
      %v240 = vadd.f32 %v238, %v239
      %v241 = vrot.slane %v240, 2
      %v242 = vadd.f32 %v240, %v241
      %v243 = vrot.slane %v242, 1
      %v244 = vadd.f32 %v242, %v243
      %v245 = vmul.f32 %v201, 0.015625
      %v246 = vmul.f32 %v207, 0.015625
      %v247 = vmul.f32 %v213, 0.015625
      %v248 = vmul.f32 %v219, 0.015625
      %v249 = vmul.f32 %v225, 0.015625
      %v250 = vmul.f32 %v231, 0.015625
      %v251 = vmul.f32 %v237, 0.015625
      %v252 = vmul.f32 %v244, 0.015625
      %v253 = vld [vmem:[%s1] sm:$0xff]
      %v254 = vld [vmem:[%s1 + $0x8] sm:$0xff]
      %v255 = vld [vmem:[%s1 + $0x10] sm:$0xff]
      %v256 = vld [vmem:[%s1 + $0x18] sm:$0xff]
      %v257 = vld [vmem:[%s1 + $0x20] sm:$0xff]
      %v258 = vld [vmem:[%s1 + $0x28] sm:$0xff]
      %v259 = vld [vmem:[%s1 + $0x30] sm:$0xff]
      %v260 = vld [vmem:[%s1 + $0x38] sm:$0xff]
      %v261 = vld [vmem:[%s1 + $0x40] sm:$0xff]
      %v262 = vld [vmem:[%s1 + $0x48] sm:$0xff]
      %v263 = vld [vmem:[%s1 + $0x50] sm:$0xff]
      %v264 = vld [vmem:[%s1 + $0x58] sm:$0xff]
      %v265 = vld [vmem:[%s1 + $0x60] sm:$0xff]
      %v266 = vld [vmem:[%s1 + $0x68] sm:$0xff]
      %v267 = vld [vmem:[%s1 + $0x70] sm:$0xff]
      %v268 = vld [vmem:[%s1 + $0x78] sm:$0xff]
      %v269 = vld [vmem:[%s1 + $0x80] sm:$0xff]
      %v270 = vld [vmem:[%s1 + $0x88] sm:$0xff]
      %v271 = vld [vmem:[%s1 + $0x90] sm:$0xff]
      %v272 = vld [vmem:[%s1 + $0x98] sm:$0xff]
      %v273 = vld [vmem:[%s1 + $0xa0] sm:$0xff]
      %v274 = vld [vmem:[%s1 + $0xa8] sm:$0xff]
      %v275 = vld [vmem:[%s1 + $0xb0] sm:$0xff]
      %v276 = vld [vmem:[%s1 + $0xb8] sm:$0xff]
      %v277 = vld [vmem:[%s1 + $0xc0] sm:$0xff]
      %v278 = vld [vmem:[%s1 + $0xc8] sm:$0xff]
      %v279 = vld [vmem:[%s1 + $0xd0] sm:$0xff]
      %v280 = vld [vmem:[%s1 + $0xd8] sm:$0xff]
      %v281 = vld [vmem:[%s1 + $0xe0] sm:$0xff]
      %v282 = vld [vmem:[%s1 + $0xe8] sm:$0xff]
      %v283 = vld [vmem:[%s1 + $0xf0] sm:$0xff]
      %v284 = vld [vmem:[%s1 + $0xf8] sm:$0xff]
      %v285 = vld [vmem:[%s1 + $0x100] sm:$0xff]
      %v286 = vld [vmem:[%s1 + $0x108] sm:$0xff]
      %v287 = vld [vmem:[%s1 + $0x110] sm:$0xff]
      %v288 = vld [vmem:[%s1 + $0x118] sm:$0xff]
      %v289 = vld [vmem:[%s1 + $0x120] sm:$0xff]
      %v290 = vld [vmem:[%s1 + $0x128] sm:$0xff]
      %v291 = vld [vmem:[%s1 + $0x130] sm:$0xff]
      %v292 = vld [vmem:[%s1 + $0x138] sm:$0xff]
      %v293 = vld [vmem:[%s1 + $0x140] sm:$0xff]
      %v294 = vld [vmem:[%s1 + $0x148] sm:$0xff]
      %v295 = vld [vmem:[%s1 + $0x150] sm:$0xff]
      %v296 = vld [vmem:[%s1 + $0x158] sm:$0xff]
      %v297 = vld [vmem:[%s1 + $0x160] sm:$0xff]
      %v298 = vld [vmem:[%s1 + $0x168] sm:$0xff]
      %v299 = vld [vmem:[%s1 + $0x170] sm:$0xff]
      %v300 = vld [vmem:[%s1 + $0x178] sm:$0xff]
      %v301 = vld [vmem:[%s1 + $0x180] sm:$0xff]
      %v302 = vld [vmem:[%s1 + $0x188] sm:$0xff]
      %v303 = vld [vmem:[%s1 + $0x190] sm:$0xff]
      %v304 = vld [vmem:[%s1 + $0x198] sm:$0xff]
      %v305 = vld [vmem:[%s1 + $0x1a0] sm:$0xff]
      %v306 = vld [vmem:[%s1 + $0x1a8] sm:$0xff]
      %v307 = vld [vmem:[%s1 + $0x1b0] sm:$0xff]
      %v308 = vld [vmem:[%s1 + $0x1b8] sm:$0xff]
      %v309 = vld [vmem:[%s1 + $0x1c0] sm:$0xff]
      %v310 = vld [vmem:[%s1 + $0x1c8] sm:$0xff]
      %v311 = vld [vmem:[%s1 + $0x1d0] sm:$0xff]
      %v312 = vld [vmem:[%s1 + $0x1d8] sm:$0xff]
      %v313 = vld [vmem:[%s1 + $0x1e0] sm:$0xff]
      %v314 = vld [vmem:[%s1 + $0x1e8] sm:$0xff]
      %v315 = vld [vmem:[%s1 + $0x1f0] sm:$0xff]
      %v316 = vld [vmem:[%s1 + $0x1f8] sm:$0xff]
      %v317 = vld [vmem:[%s1 + $0x200] sm:$0xff]
      %v318 = vld [vmem:[%s1 + $0x208] sm:$0xff]
      %v319 = vld [vmem:[%s1 + $0x210] sm:$0xff]
      %v320 = vld [vmem:[%s1 + $0x218] sm:$0xff]
      %v321 = vld [vmem:[%s1 + $0x220] sm:$0xff]
      %v322 = vld [vmem:[%s1 + $0x228] sm:$0xff]
      %v323 = vld [vmem:[%s1 + $0x230] sm:$0xff]
      %v324 = vld [vmem:[%s1 + $0x238] sm:$0xff]
      %v325 = vld [vmem:[%s1 + $0x240] sm:$0xff]
      %v326 = vld [vmem:[%s1 + $0x248] sm:$0xff]
      %v327 = vld [vmem:[%s1 + $0x250] sm:$0xff]
      %v328 = vld [vmem:[%s1 + $0x258] sm:$0xff]
      %v329 = vld [vmem:[%s1 + $0x260] sm:$0xff]
      %v330 = vld [vmem:[%s1 + $0x268] sm:$0xff]
      %v331 = vld [vmem:[%s1 + $0x270] sm:$0xff]
      %v332 = vld [vmem:[%s1 + $0x278] sm:$0xff]
      %v333 = vld [vmem:[%s1 + $0x280] sm:$0xff]
      %v334 = vld [vmem:[%s1 + $0x288] sm:$0xff]
      %v335 = vld [vmem:[%s1 + $0x290] sm:$0xff]
      %v336 = vld [vmem:[%s1 + $0x298] sm:$0xff]
      %v337 = vld [vmem:[%s1 + $0x2a0] sm:$0xff]
      %v338 = vld [vmem:[%s1 + $0x2a8] sm:$0xff]
      %v339 = vld [vmem:[%s1 + $0x2b0] sm:$0xff]
      %v340 = vld [vmem:[%s1 + $0x2b8] sm:$0xff]
      %v341 = vld [vmem:[%s1 + $0x2c0] sm:$0xff]
      %v342 = vld [vmem:[%s1 + $0x2c8] sm:$0xff]
      %v343 = vld [vmem:[%s1 + $0x2d0] sm:$0xff]
      %v344 = vld [vmem:[%s1 + $0x2d8] sm:$0xff]
      %v345 = vld [vmem:[%s1 + $0x2e0] sm:$0xff]
      %v346 = vld [vmem:[%s1 + $0x2e8] sm:$0xff]
      %v347 = vld [vmem:[%s1 + $0x2f0] sm:$0xff]
      %v348 = vld [vmem:[%s1 + $0x2f8] sm:$0xff]
      %v349 = vld [vmem:[%s1 + $0x300] sm:$0xff]
      %v350 = vld [vmem:[%s1 + $0x308] sm:$0xff]
      %v351 = vld [vmem:[%s1 + $0x310] sm:$0xff]
      %v352 = vld [vmem:[%s1 + $0x318] sm:$0xff]
      %v353 = vld [vmem:[%s1 + $0x320] sm:$0xff]
      %v354 = vld [vmem:[%s1 + $0x328] sm:$0xff]
      %v355 = vld [vmem:[%s1 + $0x330] sm:$0xff]
      %v356 = vld [vmem:[%s1 + $0x338] sm:$0xff]
      %v357 = vld [vmem:[%s1 + $0x340] sm:$0xff]
      %v358 = vld [vmem:[%s1 + $0x348] sm:$0xff]
      %v359 = vld [vmem:[%s1 + $0x350] sm:$0xff]
      %v360 = vld [vmem:[%s1 + $0x358] sm:$0xff]
      %v361 = vld [vmem:[%s1 + $0x360] sm:$0xff]
      %v362 = vld [vmem:[%s1 + $0x368] sm:$0xff]
      %v363 = vld [vmem:[%s1 + $0x370] sm:$0xff]
      %v364 = vld [vmem:[%s1 + $0x378] sm:$0xff]
      %v365 = vld [vmem:[%s1 + $0x380] sm:$0xff]
      %v366 = vld [vmem:[%s1 + $0x388] sm:$0xff]
      %v367 = vld [vmem:[%s1 + $0x390] sm:$0xff]
      %v368 = vld [vmem:[%s1 + $0x398] sm:$0xff]
      %v369 = vld [vmem:[%s1 + $0x3a0] sm:$0xff]
      %v370 = vld [vmem:[%s1 + $0x3a8] sm:$0xff]
      %v371 = vld [vmem:[%s1 + $0x3b0] sm:$0xff]
      %v372 = vld [vmem:[%s1 + $0x3b8] sm:$0xff]
      %v373 = vld [vmem:[%s2] sm:$0x1]
      %v375 = vsel %vm192, %v252, 0
      %377 = vmatprep.subr.mxu0 0.0
      %378 = vmatpush1.msra.mxu0 %v268
      %379 = vmatprep.subr.mxu0 0.0
      %380 = vmatpush1.msra.mxu0 %v267
      %381 = vmatprep.subr.mxu0 0.0
      %382 = vmatpush1.msra.mxu0 %v266
      %383 = vmatprep.subr.mxu0 0.0
      %384 = vmatpush1.msra.mxu0 %v265
      %385 = vmatprep.subr.mxu0 0.0
      %386 = vmatpush1.msra.mxu0 %v264
      %387 = vmatprep.subr.mxu0 0.0
      %388 = vmatpush1.msra.mxu0 %v263
      %389 = vmatprep.subr.mxu0 0.0
      %390 = vmatpush1.msra.mxu0 %v262
      %391 = vmatprep.subr.mxu0 0.0
      %392 = vmatpush1.msra.mxu0 %v261
      %393 = vmatprep.subr.mxu0 0.0
      %394 = vmatpush1.msra.mxu0 %v260
      %395 = vmatprep.subr.mxu0 0.0
      %396 = vmatpush1.msra.mxu0 %v259
      %397 = vmatprep.subr.mxu0 0.0
      %398 = vmatpush1.msra.mxu0 %v258
      %399 = vmatprep.subr.mxu0 0.0
      %400 = vmatpush1.msra.mxu0 %v257
      %401 = vmatprep.subr.mxu0 0.0
      %402 = vmatpush1.msra.mxu0 %v256
      %403 = vmatprep.subr.mxu0 0.0
      %404 = vmatpush1.msra.mxu0 %v255
      %405 = vmatprep.subr.mxu0 0.0
      %406 = vmatpush1.msra.mxu0 %v254
      %407 = vmatprep.subr.mxu0 0.0
      %408 = vmatpush1.msra.mxu0 %v253
      %409 = vmatprep.subr.mxu0 0.0
      %410 = vmatpush2.msra.mxu0 %v284
      %411 = vmatprep.subr.mxu0 0.0
      %412 = vmatpush2.msra.mxu0 %v283
      %413 = vmatprep.subr.mxu0 0.0
      %414 = vmatpush2.msra.mxu0 %v282
      %415 = vmatprep.subr.mxu0 0.0
      %416 = vmatpush2.msra.mxu0 %v281
      %417 = vmatprep.subr.mxu0 0.0
      %418 = vmatpush2.msra.mxu0 %v280
      %419 = vmatprep.subr.mxu0 0.0
      %420 = vmatpush2.msra.mxu0 %v279
      %421 = vmatprep.subr.mxu0 0.0
      %422 = vmatpush2.msra.mxu0 %v278
      %423 = vmatprep.subr.mxu0 0.0
      %424 = vmatpush2.msra.mxu0 %v277
      %425 = vmatprep.subr.mxu0 0.0
      %426 = vmatpush2.msra.mxu0 %v276
      %427 = vmatprep.subr.mxu0 0.0
      %428 = vmatpush2.msra.mxu0 %v275
      %429 = vmatprep.subr.mxu0 0.0
      %430 = vmatpush2.msra.mxu0 %v274
      %431 = vmatprep.subr.mxu0 0.0
      %432 = vmatpush2.msra.mxu0 %v273
      %433 = vmatprep.subr.mxu0 0.0
      %434 = vmatpush2.msra.mxu0 %v272
      %435 = vmatprep.subr.mxu0 0.0
      %436 = vmatpush2.msra.mxu0 %v271
      %437 = vmatprep.subr.mxu0 0.0
      %438 = vmatpush2.msra.mxu0 %v270
      %439 = vmatprep.subr.mxu0 0.0
      %440 = vmatpush2.msra.mxu0 %v269
      %441 = vmatprep.mubr.f32.mxu0 %v246
      %442 = vmatmul.mubr.f32.gmra.mxu0 %v245
      %v443 = vpop.f32.mrf.mxu0
      %v444 = vadd.f32 %v373, %v443
      %v445 = vpop.f32.mrf.mxu0
      %446 = vdwg.mxu0
      %447 = vmatprep.subr.mxu0 0.0
      %448 = vmatpush1.msra.mxu0 %v300
      %449 = vmatprep.subr.mxu0 0.0
      %450 = vmatpush1.msra.mxu0 %v299
      %451 = vmatprep.subr.mxu0 0.0
      %452 = vmatpush1.msra.mxu0 %v298
      %453 = vmatprep.subr.mxu0 0.0
      %454 = vmatpush1.msra.mxu0 %v297
      %455 = vmatprep.subr.mxu0 0.0
      %456 = vmatpush1.msra.mxu0 %v296
      %457 = vmatprep.subr.mxu0 0.0
      %458 = vmatpush1.msra.mxu0 %v295
      %459 = vmatprep.subr.mxu0 0.0
      %460 = vmatpush1.msra.mxu0 %v294
      %461 = vmatprep.subr.mxu0 0.0
      %462 = vmatpush1.msra.mxu0 %v293
      %463 = vmatprep.subr.mxu0 0.0
      %464 = vmatpush1.msra.mxu0 %v292
      %465 = vmatprep.subr.mxu0 0.0
      %466 = vmatpush1.msra.mxu0 %v291
      %467 = vmatprep.subr.mxu0 0.0
      %468 = vmatpush1.msra.mxu0 %v290
      %469 = vmatprep.subr.mxu0 0.0
      %470 = vmatpush1.msra.mxu0 %v289
      %471 = vmatprep.subr.mxu0 0.0
      %472 = vmatpush1.msra.mxu0 %v288
      %473 = vmatprep.subr.mxu0 0.0
      %474 = vmatpush1.msra.mxu0 %v287
      %475 = vmatprep.subr.mxu0 0.0
      %476 = vmatpush1.msra.mxu0 %v286
      %477 = vmatprep.subr.mxu0 0.0
      %478 = vmatpush1.msra.mxu0 %v285
      %479 = vmatprep.subr.mxu0 0.0
      %480 = vmatpush2.msra.mxu0 %v316
      %481 = vmatprep.subr.mxu0 0.0
      %482 = vmatpush2.msra.mxu0 %v315
      %483 = vmatprep.subr.mxu0 0.0
      %484 = vmatpush2.msra.mxu0 %v314
      %485 = vmatprep.subr.mxu0 0.0
      %486 = vmatpush2.msra.mxu0 %v313
      %487 = vmatprep.subr.mxu0 0.0
      %488 = vmatpush2.msra.mxu0 %v312
      %489 = vmatprep.subr.mxu0 0.0
      %490 = vmatpush2.msra.mxu0 %v311
      %491 = vmatprep.subr.mxu0 0.0
      %492 = vmatpush2.msra.mxu0 %v310
      %493 = vmatprep.subr.mxu0 0.0
      %494 = vmatpush2.msra.mxu0 %v309
      %495 = vmatprep.subr.mxu0 0.0
      %496 = vmatpush2.msra.mxu0 %v308
      %497 = vmatprep.subr.mxu0 0.0
      %498 = vmatpush2.msra.mxu0 %v307
      %499 = vmatprep.subr.mxu0 0.0
      %500 = vmatpush2.msra.mxu0 %v306
      %501 = vmatprep.subr.mxu0 0.0
      %502 = vmatpush2.msra.mxu0 %v305
      %503 = vmatprep.subr.mxu0 0.0
      %504 = vmatpush2.msra.mxu0 %v304
      %505 = vmatprep.subr.mxu0 0.0
      %506 = vmatpush2.msra.mxu0 %v303
      %507 = vmatprep.subr.mxu0 0.0
      %508 = vmatpush2.msra.mxu0 %v302
      %509 = vmatprep.subr.mxu0 0.0
      %510 = vmatpush2.msra.mxu0 %v301
      %511 = vmatprep.mubr.f32.mxu0 %v248
      %512 = vmatmul.mubr.f32.gmra.mxu0 %v247
      %v513 = vpop.f32.mrf.mxu0
      %v514 = vadd.f32 %v444, %v513
      %v515 = vpop.f32.mrf.mxu0
      %516 = vdwg.mxu0
      %517 = vmatprep.subr.mxu0 0.0
      %518 = vmatpush1.msra.mxu0 %v332
      %519 = vmatprep.subr.mxu0 0.0
      %520 = vmatpush1.msra.mxu0 %v331
      %521 = vmatprep.subr.mxu0 0.0
      %522 = vmatpush1.msra.mxu0 %v330
      %523 = vmatprep.subr.mxu0 0.0
      %524 = vmatpush1.msra.mxu0 %v329
      %525 = vmatprep.subr.mxu0 0.0
      %526 = vmatpush1.msra.mxu0 %v328
      %527 = vmatprep.subr.mxu0 0.0
      %528 = vmatpush1.msra.mxu0 %v327
      %529 = vmatprep.subr.mxu0 0.0
      %530 = vmatpush1.msra.mxu0 %v326
      %531 = vmatprep.subr.mxu0 0.0
      %532 = vmatpush1.msra.mxu0 %v325
      %533 = vmatprep.subr.mxu0 0.0
      %534 = vmatpush1.msra.mxu0 %v324
      %535 = vmatprep.subr.mxu0 0.0
      %536 = vmatpush1.msra.mxu0 %v323
      %537 = vmatprep.subr.mxu0 0.0
      %538 = vmatpush1.msra.mxu0 %v322
      %539 = vmatprep.subr.mxu0 0.0
      %540 = vmatpush1.msra.mxu0 %v321
      %541 = vmatprep.subr.mxu0 0.0
      %542 = vmatpush1.msra.mxu0 %v320
      %543 = vmatprep.subr.mxu0 0.0
      %544 = vmatpush1.msra.mxu0 %v319
      %545 = vmatprep.subr.mxu0 0.0
      %546 = vmatpush1.msra.mxu0 %v318
      %547 = vmatprep.subr.mxu0 0.0
      %548 = vmatpush1.msra.mxu0 %v317
      %549 = vmatprep.subr.mxu0 0.0
      %550 = vmatpush2.msra.mxu0 %v348
      %551 = vmatprep.subr.mxu0 0.0
      %552 = vmatpush2.msra.mxu0 %v347
      %553 = vmatprep.subr.mxu0 0.0
      %554 = vmatpush2.msra.mxu0 %v346
      %555 = vmatprep.subr.mxu0 0.0
      %556 = vmatpush2.msra.mxu0 %v345
      %557 = vmatprep.subr.mxu0 0.0
      %558 = vmatpush2.msra.mxu0 %v344
      %559 = vmatprep.subr.mxu0 0.0
      %560 = vmatpush2.msra.mxu0 %v343
      %561 = vmatprep.subr.mxu0 0.0
      %562 = vmatpush2.msra.mxu0 %v342
      %563 = vmatprep.subr.mxu0 0.0
      %564 = vmatpush2.msra.mxu0 %v341
      %565 = vmatprep.subr.mxu0 0.0
      %566 = vmatpush2.msra.mxu0 %v340
      %567 = vmatprep.subr.mxu0 0.0
      %568 = vmatpush2.msra.mxu0 %v339
      %569 = vmatprep.subr.mxu0 0.0
      %570 = vmatpush2.msra.mxu0 %v338
      %571 = vmatprep.subr.mxu0 0.0
      %572 = vmatpush2.msra.mxu0 %v337
      %573 = vmatprep.subr.mxu0 0.0
      %574 = vmatpush2.msra.mxu0 %v336
      %575 = vmatprep.subr.mxu0 0.0
      %576 = vmatpush2.msra.mxu0 %v335
      %577 = vmatprep.subr.mxu0 0.0
      %578 = vmatpush2.msra.mxu0 %v334
      %579 = vmatprep.subr.mxu0 0.0
      %580 = vmatpush2.msra.mxu0 %v333
      %581 = vmatprep.mubr.f32.mxu0 %v250
      %582 = vmatmul.mubr.f32.gmra.mxu0 %v249
      %v583 = vpop.f32.mrf.mxu0
      %v584 = vadd.f32 %v514, %v583
      %v585 = vpop.f32.mrf.mxu0
      %586 = vdwg.mxu0
      %587 = vmatprep.subr.mxu0 0.0
      %588 = vmatpush1.msra.mxu0 %v364
      %589 = vmatprep.subr.mxu0 0.0
      %590 = vmatpush1.msra.mxu0 %v363
      %591 = vmatprep.subr.mxu0 0.0
      %592 = vmatpush1.msra.mxu0 %v362
      %593 = vmatprep.subr.mxu0 0.0
      %594 = vmatpush1.msra.mxu0 %v361
      %595 = vmatprep.subr.mxu0 0.0
      %596 = vmatpush1.msra.mxu0 %v360
      %597 = vmatprep.subr.mxu0 0.0
      %598 = vmatpush1.msra.mxu0 %v359
      %599 = vmatprep.subr.mxu0 0.0
      %600 = vmatpush1.msra.mxu0 %v358
      %601 = vmatprep.subr.mxu0 0.0
      %602 = vmatpush1.msra.mxu0 %v357
      %603 = vmatprep.subr.mxu0 0.0
      %604 = vmatpush1.msra.mxu0 %v356
      %605 = vmatprep.subr.mxu0 0.0
      %606 = vmatpush1.msra.mxu0 %v355
      %607 = vmatprep.subr.mxu0 0.0
      %608 = vmatpush1.msra.mxu0 %v354
      %609 = vmatprep.subr.mxu0 0.0
      %610 = vmatpush1.msra.mxu0 %v353
      %611 = vmatprep.subr.mxu0 0.0
      %612 = vmatpush1.msra.mxu0 %v352
      %613 = vmatprep.subr.mxu0 0.0
      %614 = vmatpush1.msra.mxu0 %v351
      %615 = vmatprep.subr.mxu0 0.0
      %616 = vmatpush1.msra.mxu0 %v350
      %617 = vmatprep.subr.mxu0 0.0
      %618 = vmatpush1.msra.mxu0 %v349
      %619 = vmatprep.subr.mxu0 0.0
      %620 = vmatpush2.msra.mxu0 0.0
      %621 = vmatprep.subr.mxu0 0.0
      %622 = vmatpush2.msra.mxu0 0.0
      %623 = vmatprep.subr.mxu0 0.0
      %624 = vmatpush2.msra.mxu0 0.0
      %625 = vmatprep.subr.mxu0 0.0
      %626 = vmatpush2.msra.mxu0 0.0
      %627 = vmatprep.subr.mxu0 0.0
      %628 = vmatpush2.msra.mxu0 0.0
      %629 = vmatprep.subr.mxu0 0.0
      %630 = vmatpush2.msra.mxu0 0.0
      %631 = vmatprep.subr.mxu0 0.0
      %632 = vmatpush2.msra.mxu0 0.0
      %633 = vmatprep.subr.mxu0 0.0
      %634 = vmatpush2.msra.mxu0 0.0
      %635 = vmatprep.subr.mxu0 0.0
      %636 = vmatpush2.msra.mxu0 %v372
      %637 = vmatprep.subr.mxu0 0.0
      %638 = vmatpush2.msra.mxu0 %v371
      %639 = vmatprep.subr.mxu0 0.0
      %640 = vmatpush2.msra.mxu0 %v370
      %641 = vmatprep.subr.mxu0 0.0
      %642 = vmatpush2.msra.mxu0 %v369
      %643 = vmatprep.subr.mxu0 0.0
      %644 = vmatpush2.msra.mxu0 %v368
      %645 = vmatprep.subr.mxu0 0.0
      %646 = vmatpush2.msra.mxu0 %v367
      %647 = vmatprep.subr.mxu0 0.0
      %648 = vmatpush2.msra.mxu0 %v366
      %649 = vmatprep.subr.mxu0 0.0
      %650 = vmatpush2.msra.mxu0 %v365
      %651 = vmatprep.mubr.f32.mxu0 %v375
      %652 = vmatmul.mubr.f32.gmra.mxu0 %v251
      %v653 = vpop.f32.mrf.mxu0
      %v654 = vadd.f32 %v584, %v653
      %v655 = vpop.f32.mrf.mxu0
      %656 = vdwg.mxu0
      %v657 = vlaneseq
      %v658 = vshrl.u32 %v657, 7
      %v659 = vsub.s32 0, %v658
      %v660 = vrot.slane %v654, %v659
      %661 = vst [vmem:[%s168] sm:$0xff] %v660
      %p662 = scmp.lt.s32.totalorder %s14, 1
      %s663 = scalar_select %p662, %s14, 1
      %s664 = smul.addr %s663, 8
      %s665 = scalar_lea.vmem %s3, %s664
      // Predicated region
      $region33: #{_forward_impl.3} parent=31 // pred_check
        %p666 = pneg %p100
      $region34: #{_forward_impl.3} parent=31 // pred_check_branch
        %668 = sbr.rel (%p666) target = $region36
      $region35: #{_forward_impl.3} parent=31 // pred_region
        _
      $region36: #{_forward_impl.3} parent=31 // pred_fallthru
        _
    $region32: #{_forward_impl.3} parent=5 // pred_fallthru
      _
    %p669 = scmp.le.s32.totalorder 2, %s9
    // Predicated region
    $region37: #{_forward_impl.3} parent=5 // pred_check
      %p670 = pneg %p669
    $region38: #{_forward_impl.3} parent=5 // pred_check_branch
      %672 = sbr.rel (%p670) target = $region40
    $region39: #{_forward_impl.3} parent=5 // pred_region
      %s673 = ssub.s32 %s9, 2
      // Predicated region
      $region41: #{_forward_impl.3} parent=39 // pred_check
        %p674 = pneg %p106
      $region42: #{_forward_impl.3} parent=39 // pred_check_branch
        %676 = sbr.rel (%p674) target = $region44
      $region43: #{_forward_impl.3} parent=39 // pred_region
        %p677 = scmp.lt.s32.totalorder %s15, 1
        %s678 = scalar_select %p677, %s15, 1
        %s679 = smul.addr %s678, 8
        %s680 = scalar_lea.vmem %s3, %s679
      $region44: #{_forward_impl.3} parent=39 // pred_fallthru
        _
    $region40: #{_forward_impl.3} parent=5 // pred_fallthru
      _
  $region6: #{_forward_impl.3} parent=0 // loop_footer
    %s13 = sadd.s32 1, %s9
  $region7: #{_forward_impl.3} parent=0 // loop_footer_branch
    %8 = sbr.rel target = $region3
  $region8: #{_forward_impl.3} parent=0 // loop_exit
    _

</llo_original>
